<compile_context>
chip_gen: v6e
topology: v6e:2x2x1
jax: 0.10.0
libtpu: 0.0.40
codegen_flags: <defaults>
</compile_context>

<pallas_src>
import functools

import jax
import jax.numpy as jnp
from jax.experimental import pallas as pl
from jax.experimental.pallas import tpu as pltpu


def _round_up(x, m):
    return (x + m - 1) // m * m


# --------------------------------------------------------------------------
# Tiled matmul kernels with fused bias + activation epilogue
# --------------------------------------------------------------------------
def _epilogue(acc, bias, act):
    acc = acc + bias
    if act == "leaky":                     # LeakyReLU(0.2)
        acc = jnp.where(acc >= 0, acc, 0.2 * acc)
    elif act == "tanh":
        acc = jnp.tanh(acc)
    return acc


def _mm_kernel_single(a_ref, b_ref, bias_ref, o_ref, *, act):
    # Whole reduction in one block: no accumulator scratch, no revisits.
    acc = jnp.dot(a_ref[...], b_ref[...], preferred_element_type=jnp.float32)
    o_ref[...] = _epilogue(acc, bias_ref[...], act).astype(o_ref.dtype)


def _mm_kernel_multi(a_ref, b_ref, bias_ref, o_ref, acc_ref, *, act):
    @pl.when(pl.program_id(2) == 0)
    def _init():
        acc_ref[...] = jnp.zeros_like(acc_ref)

    acc_ref[...] += jnp.dot(a_ref[...], b_ref[...],
                            preferred_element_type=jnp.float32)

    @pl.when(pl.program_id(2) == pl.num_programs(2) - 1)
    def _fin():
        o_ref[...] = _epilogue(acc_ref[...], bias_ref[...], act).astype(o_ref.dtype)


@functools.partial(jax.jit, static_argnames=("act", "out_dtype"))
def _matmul_impl(a, b, bias, act, out_dtype):
    M, K = a.shape
    _, N = b.shape
    a = a.astype(jnp.bfloat16)
    b = b.astype(jnp.bfloat16)
    bias = bias.astype(jnp.float32)

    # ---- tile selection ----
    if M >= 4096:
        bm = 1024
    elif M >= 512:
        bm = 512
    else:
        bm = _round_up(M, 8)
    Mp = _round_up(M, bm)

    Kp = _round_up(K, 128)
    if Kp > 2048:
        bk = 2048
        Kp = _round_up(Kp, bk)
    else:
        bk = Kp

    Np = _round_up(N, 128)
    bn = 512 if Np % 512 == 0 else (256 if Np % 256 == 0 else 128)

    if (Mp, Kp) != (M, K):
        a = jnp.pad(a, ((0, Mp - M), (0, Kp - K)))
    if (Kp, Np) != (K, N):
        b = jnp.pad(b, ((0, Kp - K), (0, Np - N)))
    if Np != N:
        bias = jnp.pad(bias, ((0, 0), (0, Np - N)))

    nk = Kp // bk
    if nk == 1:
        grid = (Mp // bm, Np // bn)
        grid_spec = pltpu.PrefetchScalarGridSpec(
            num_scalar_prefetch=0,
            grid=grid,
            in_specs=[pl.BlockSpec((bm, bk), lambda i, j: (i, 0)),
                      pl.BlockSpec((bk, bn), lambda i, j: (0, j)),
                      pl.BlockSpec((1, bn), lambda i, j: (0, j))],
            out_specs=pl.BlockSpec((bm, bn), lambda i, j: (i, j)),
        )
        kernel = functools.partial(_mm_kernel_single, act=act)
        dim_sem = ("parallel", "parallel")
    else:
        grid = (Mp // bm, Np // bn, nk)
        grid_spec = pltpu.PrefetchScalarGridSpec(
            num_scalar_prefetch=0,
            grid=grid,
            in_specs=[pl.BlockSpec((bm, bk), lambda i, j, k: (i, k)),
                      pl.BlockSpec((bk, bn), lambda i, j, k: (k, j)),
                      pl.BlockSpec((1, bn), lambda i, j, k: (0, j))],
            out_specs=pl.BlockSpec((bm, bn), lambda i, j, k: (i, j)),
            scratch_shapes=[pltpu.VMEM((bm, bn), jnp.float32)],
        )
        kernel = functools.partial(_mm_kernel_multi, act=act)
        dim_sem = ("parallel", "parallel", "arbitrary")

    out = pl.pallas_call(
        kernel,
        out_shape=jax.ShapeDtypeStruct((Mp, Np), out_dtype),
        grid_spec=grid_spec,
        compiler_params=pltpu.CompilerParams(dimension_semantics=dim_sem),
    )(a, b, bias)

    if (Mp, Np) != (M, N):
        out = out[:M, :N]
    return out


def pallas_matmul(a, b, act="none", bias=None, out_dtype=jnp.bfloat16):
    """act(A @ B + bias); A:[M,K], B:[K,N]."""
    N = b.shape[1]
    if bias is None:
        bias = jnp.zeros((1, N), jnp.float32)
    else:
        bias = jnp.asarray(bias).reshape(1, N).astype(jnp.float32)
    return _matmul_impl(a, b, bias, act=act, out_dtype=out_dtype)


# --------------------------------------------------------------------------
# InstanceNorm2d (affine=False, eps=1e-5, biased var) + ReLU kernel
# --------------------------------------------------------------------------
def _in_relu_kernel(x_ref, o_ref):
    x = x_ref[...].astype(jnp.float32)               # (1, H*W, C)
    mean = jnp.mean(x, axis=1, keepdims=True)
    var = jnp.mean(jnp.square(x - mean), axis=1, keepdims=True)
    y = (x - mean) * jax.lax.rsqrt(var + 1e-5)
    o_ref[...] = jnp.maximum(y, 0.0).astype(o_ref.dtype)


@jax.jit
def instance_norm_relu(x):
    # x: [N, H, W, C] (bf16 or f32); stats computed in f32, output keeps x.dtype.
    N, H, W, C = x.shape
    xr = x.reshape(N, H * W, C)
    out = pl.pallas_call(
        _in_relu_kernel,
        out_shape=jax.ShapeDtypeStruct((N, H * W, C), x.dtype),
        grid=(N,),
        in_specs=[pl.BlockSpec((1, H * W, C), lambda n: (n, 0, 0))],
        out_specs=pl.BlockSpec((1, H * W, C), lambda n: (n, 0, 0)),
    )(xr)
    return out.reshape(N, H, W, C)


# --------------------------------------------------------------------------
# Convolutions: im2col (plain-JAX glue, bf16) + Pallas MXU matmul (hot path)
# --------------------------------------------------------------------------
def conv2d(x, w, stride, pad, act="none", bias=None, out_dtype=jnp.bfloat16):
    # x: [N,H,W,Cin]; w: [KH,KW,Cin,Cout]  (PyTorch Conv2d weight.permute(2,3,1,0))
    x = x.astype(jnp.bfloat16)
    N, H, W, Cin = x.shape
    KH, KW, _, Cout = w.shape
    xp = jnp.pad(x, ((0, 0), (pad, pad), (pad, pad), (0, 0)))
    OH = (H + 2 * pad - KH) // stride + 1
    OW = (W + 2 * pad - KW) // stride + 1
    cols = []
    for ky in range(KH):
        for kx in range(KW):
            cols.append(xp[:, ky:ky + stride * (OH - 1) + 1:stride,
                            kx:kx + stride * (OW - 1) + 1:stride, :])
    patches = jnp.concatenate(cols, axis=-1).reshape(N * OH * OW, KH * KW * Cin)
    wm = w.reshape(KH * KW * Cin, Cout)
    y = pallas_matmul(patches, wm, act=act, bias=bias, out_dtype=out_dtype)
    return y.reshape(N, OH, OW, Cout)


def conv_transpose2d(x, wt):
    # ConvTranspose2d(Cin, Cout, 4, stride=2, padding=1, bias=False) via the sub-pixel
    # decomposition: one 2x2/stride-1 conv per output-pixel parity (a, b), a,b in {0,1}:
    #   y[2m+a, 2n+b] = sum_{i,j} x[m+dr_i, n+dc_j] . wt[ky_i, kx_j]
    # with (dr, ky) = ((-1,3),(0,1)) for parity 0 and ((0,2),(+1,0)) for parity 1 (same for cols).
    # wt: [4,4,Cin,Cout], wt[ky,kx,ic,oc] == torch ConvTranspose2d weight[ic,oc,ky,kx].
    x = x.astype(jnp.bfloat16)
    N, H, W, Cin = x.shape
    Cout = wt.shape[-1]
    xp = jnp.pad(x, ((0, 0), (1, 1), (1, 1), (0, 0)))
    ks = {0: (3, 1), 1: (2, 0)}
    offs = {0: (-1, 0), 1: (0, 1)}

    y = [[None, None], [None, None]]
    for a in (0, 1):
        for b in (0, 1):
            cols, wrows = [], []
            for i, dr in enumerate(offs[a]):
                for j, dc in enumerate(offs[b]):
                    cols.append(xp[:, 1 + dr:1 + dr + H, 1 + dc:1 + dc + W, :])
                    wrows.append(wt[ks[a][i], ks[b][j]])          # [Cin, Cout]
            patches = jnp.concatenate(cols, axis=-1).reshape(N * H * W, 4 * Cin)
            wm = jnp.concatenate(wrows, axis=0)                    # [4*Cin, Cout]
            y[a][b] = pallas_matmul(patches, wm).reshape(N, H, W, Cout)

    # interleave parities: out[:, 2i+a, 2j+b] = y[a][b][:, i, j]
    row0 = jnp.stack([y[0][0], y[0][1]], axis=3).reshape(N, H, 2 * W, Cout)
    row1 = jnp.stack([y[1][0], y[1][1]], axis=3).reshape(N, H, 2 * W, Cout)
    return jnp.stack([row0, row1], axis=2).reshape(N, 2 * H, 2 * W, Cout)


def final_layer(u, w, bias):
    """Fused nearest Upsample(x2) + ZeroPad2d((1,0,1,0)) + Conv2d(Cin,3,4,padding=1) + Tanh.

    Because the conv input is a nearest 2x upsample, each output parity (a,b) only sees a
    3x3 window of the ORIGINAL feature map, with an effective kernel obtained by summing the
    4x4 taps that land on the same source pixel:
        out[2m+a, 2n+b] = tanh( sum_{dr,dc in {-1,0,+1}} u_z[m+dr, n+dc] . Weff[a,b,dr,dc] + bias )
    All 4 parities share the same 3x3 im2col and are computed in ONE matmul by stacking their
    effective kernels along the output-channel axis (columns = (parity, cout)).
    """
    u = u.astype(jnp.bfloat16)
    N, H, W, Cin = u.shape
    Cout = w.shape[-1]
    w = w.astype(jnp.float32)

    # 4x4 taps ky that read source-row offset dr, per output-row parity a (cols identical).
    taps = {0: {-1: (0, 1), 0: (2, 3)},
            1: {-1: (0,), 0: (1, 2), 1: (3,)}}

    zeros = jnp.zeros((Cin, Cout), jnp.float32)
    blocks = []
    for dr in (-1, 0, 1):
        for dc in (-1, 0, 1):
            par = []
            for a in (0, 1):
                for b in (0, 1):
                    kys = taps[a].get(dr, ())
                    kxs = taps[b].get(dc, ())
                    if kys and kxs:
                        par.append(sum(w[ky, kx] for ky in kys for kx in kxs))
                    else:
                        par.append(zeros)
                    # column index = (2a+b)*Cout + c
            blocks.append(jnp.stack(par, axis=1))                   # (Cin, 4, Cout)
    wm = jnp.stack(blocks, axis=0).reshape(9 * Cin, 4 * Cout)       # rows = (tap, cin)
    bias4 = jnp.tile(jnp.asarray(bias).reshape(-1), 4)              # cols = (parity, cout)

    # shared 3x3 im2col on the zero-padded original feature map
    xp = jnp.pad(u, ((0, 0), (1, 1), (1, 1), (0, 0)))
    cols = [xp[:, dr:dr + H, dc:dc + W, :] for dr in range(3) for dc in range(3)]
    patches = jnp.concatenate(cols, axis=-1).reshape(N * H * W, 9 * Cin)

    y = pallas_matmul(patches, wm, act="tanh", bias=bias4, out_dtype=jnp.float32)
    y = y.reshape(N, H, W, 2, 2, Cout)                               # [n, m, q, a, b, c]
    y = jnp.transpose(y, (0, 1, 3, 2, 4, 5)).reshape(N, 2 * H, 2 * W, Cout)
    return y


# --------------------------------------------------------------------------
# Generator: parameters + forward
# --------------------------------------------------------------------------
_DOWN_CH = [(3, 64), (64, 128), (128, 256), (256, 512),
            (512, 512), (512, 512), (512, 512), (512, 512)]
_UP_CH = [(512, 512), (1024, 512), (1024, 512), (1024, 512),
          (1024, 256), (512, 128), (256, 64)]


def make_params(key):
    params = {}
    n_keys = len(_DOWN_CH) + len(_UP_CH) + 2
    keys = list(jax.random.split(key, n_keys))

    def conv_w(k, cin, cout):
        fan_in = 4 * 4 * cin
        w = jax.random.normal(k, (4, 4, cin, cout), jnp.float32) / jnp.sqrt(fan_in)
        return w.astype(jnp.bfloat16)                # weights stored bf16 (MXU fast path)

    for i, (cin, cout) in enumerate(_DOWN_CH):
        params[f"down{i + 1}"] = conv_w(keys.pop(0), cin, cout)
    for i, (cin, cout) in enumerate(_UP_CH):
        params[f"up{i + 1}"] = conv_w(keys.pop(0), cin, cout)   # [ky,kx,Cin,Cout]
    params["final_w"] = conv_w(keys.pop(0), 128, 3)
    params["final_b"] = 0.01 * jax.random.normal(keys.pop(0), (3,), jnp.float32)
    return params


def generator_forward(params, x_nchw):
    x = jnp.transpose(x_nchw, (0, 2, 3, 1))                       # NCHW -> NHWC

    # encoder: Conv(4,2,1, no bias) + LeakyReLU(0.2), fused in the matmul epilogue (bf16 out)
    d = []
    h = x
    for i in range(8):
        h = conv2d(h, params[f"down{i + 1}"], stride=2, pad=1, act="leaky")
        d.append(h)

    # decoder: ConvTranspose(4,2,1, no bias) + InstanceNorm + ReLU, then skip concat (bf16)
    u = d[7]
    for i in range(7):
        u = conv_transpose2d(u, params[f"up{i + 1}"])
        u = instance_norm_relu(u)
        u = jnp.concatenate([u, d[6 - i]], axis=-1)   # torch.cat((x, skip), dim=1)

    # final: nearest Upsample(x2) + ZeroPad2d((1,0,1,0)) + Conv2d(128,3,4,pad=1)+bias + Tanh,
    # fused into one sub-pixel matmul (f32 output).
    y = final_layer(u, params["final_w"], params["final_b"])
    return jnp.transpose(y, (0, 3, 1, 2))                          # NHWC -> NCHW


if __name__ == "__main__":
    key = jax.random.PRNGKey(0)
    pkey, xkey = jax.random.split(key)
    params = make_params(pkey)

    # 256x256 is the smallest spatial size the 8-level U-Net supports (1x1 bottleneck);
    # batch=1 keeps the run small.
    x = jax.random.normal(xkey, (1, 3, 256, 256), jnp.float32)

    out = generator_forward(params, x)
    out = jax.block_until_ready(out)

    assert out.shape == (1, 3, 256, 256), out.shape
    assert out.dtype == jnp.float32
    assert bool(jnp.isfinite(out).all())
    assert bool((jnp.abs(out) <= 1.0).all())   # tanh output range
    print("KERNEL_OK")
</pallas_src>

<mosaic_0001>
module attributes {stable_mosaic.version = 11 : i64} {
  func.func @_mm_kernel_single(%arg0: i32, %arg1: i32, %arg2: memref<1024x128xbf16, #tpu.memory_space<vmem>>, %arg3: memref<128x128xbf16, #tpu.memory_space<vmem>>, %arg4: memref<1x128xf32, #tpu.memory_space<vmem>>, %arg5: memref<1024x128xbf16, #tpu.memory_space<vmem>>) attributes {dimension_semantics = [#tpu.dimension_semantics<parallel>, #tpu.dimension_semantics<parallel>], iteration_bounds = array<i64: 16, 1>, scalar_prefetch = 0 : i64, scratch_operands = 0 : i64, tpu.core_type = #tpu.core_type<tc>, window_params = [{transform_indices = @transform_0, window_bounds = array<i64: 1024, 128>}, {transform_indices = @transform_1, window_bounds = array<i64: 128, 128>}, {transform_indices = @transform_2, window_bounds = array<i64: 1, 128>}, {transform_indices = @transform_3, window_bounds = array<i64: 1024, 128>}]} {
    %c0 = arith.constant 0 : index
    %c0_0 = arith.constant 0 : index
    %0 = vector.load %arg2[%c0, %c0_0] : memref<1024x128xbf16, #tpu.memory_space<vmem>>, vector<1024x128xbf16>
    %c0_1 = arith.constant 0 : index
    %c0_2 = arith.constant 0 : index
    %1 = vector.load %arg3[%c0_1, %c0_2] : memref<128x128xbf16, #tpu.memory_space<vmem>>, vector<128x128xbf16>
    %cst = arith.constant dense<0.000000e+00> : vector<1024x128xf32>
    %2 = tpu.matmul %0, %1, %cst {dimension_numbers = #tpu.dot_dimension_numbers<[1], [0], [0], [1], [0, 0, 1, 1], [], []>} : vector<1024x128xbf16>, vector<128x128xbf16>, vector<1024x128xf32> -> vector<1024x128xf32>
    %c0_3 = arith.constant 0 : index
    %c0_4 = arith.constant 0 : index
    %3 = vector.load %arg4[%c0_3, %c0_4] : memref<1x128xf32, #tpu.memory_space<vmem>>, vector<1x128xf32>
    %4 = vector.broadcast %3 : vector<1x128xf32> to vector<1024x128xf32>
    %5 = arith.addf %2, %4 : vector<1024x128xf32>
    %cst_5 = arith.constant 0.000000e+00 : f32
    %6 = vector.broadcast %cst_5 : f32 to vector<1024x128xf32>
    %7 = arith.cmpf oge, %5, %6 : vector<1024x128xf32>
    %cst_6 = arith.constant 2.000000e-01 : f32
    %8 = vector.broadcast %cst_6 : f32 to vector<1024x128xf32>
    %9 = arith.mulf %8, %5 : vector<1024x128xf32>
    %10 = arith.select %7, %5, %9 : vector<1024x128xi1>, vector<1024x128xf32>
    %11 = arith.truncf %10 : vector<1024x128xf32> to vector<1024x128xbf16>
    %c0_7 = arith.constant 0 : index
    %c0_8 = arith.constant 0 : index
    %12 = vector.load %arg5[%c0_7, %c0_8] : memref<1024x128xbf16, #tpu.memory_space<vmem>>, vector<1024x128xbf16>
    tpu.vector_store %arg5[%c0_7, %c0_8], %11 {strides = array<i32>} : memref<1024x128xbf16, #tpu.memory_space<vmem>>, vector<1024x128xbf16>,
    return
  }
  func.func @transform_0(%arg0: i32, %arg1: i32) -> (i32, i32) {
    %c0_i32 = arith.constant 0 : i32
    %c0_i32_0 = arith.constant 0 : i32
    return %arg0, %c0_i32 : i32, i32
  }
  func.func @transform_1(%arg0: i32, %arg1: i32) -> (i32, i32) {
    %c0_i32 = arith.constant 0 : i32
    %c0_i32_0 = arith.constant 0 : i32
    return %c0_i32, %arg1 : i32, i32
  }
  func.func @transform_2(%arg0: i32, %arg1: i32) -> (i32, i32) {
    %c0_i32 = arith.constant 0 : i32
    %c0_i32_0 = arith.constant 0 : i32
    return %c0_i32, %arg1 : i32, i32
  }
  func.func @transform_3(%arg0: i32, %arg1: i32) -> (i32, i32) {
    %c0_i32 = arith.constant 0 : i32
    return %arg0, %arg1 : i32, i32
  }
}

</mosaic_0001>

<llo_original>
// kernel: _matmul_impl.1
$region0: #{_matmul_impl.1}
  #allocation0 [shape = 'u32[]', space=smem, size = 0x4, offset = 0x4, fixed_abs, tag = 'smem constant byte address 0x4 - core index']
  #allocation1 [shape = 'u32[144,128]{1,0:T(1,128)}', space=vmem, size = 0x12000, scoped, tag = 'internal scratch']
  %s0 = inlined_call_operand.vmem [shape: bf16[16384,128], index: 0, kind: input, shape index: {}]
  %s1 = inlined_call_operand.vmem [shape: bf16[128,128], index: 1, kind: input, shape index: {}]
  %s2 = inlined_call_operand.vmem [shape: f32[1,128], index: 2, kind: input, shape index: {}]
  %s3 = inlined_call_operand.vmem [shape: bf16[16384,128], index: 3, kind: output, shape index: {}]
  %s4 = sld [smem:[#allocation0]]
  $region45: #{_matmul_impl.1} parent=0
    _
  %s6 = ssub.s32 1, %s4
  %s7 = scalar_select 0, %s6, %s4
  loop: start=0, step=1, limit=18
  $region2: #{_matmul_impl.1} parent=0 // loop_pre_header
    _
  $region3: #{_matmul_impl.1} parent=0 // loop_header
    %s9 = sphi 0, %s13
    %p10 = scmp.ge.s32.totalorder %s9, 18
    %s16 = sphi 0, %s28
    %s17 = sphi 0, %s24
    %s18 = sphi 0, %s16
    %s19 = sphi 0, %s17
    %s20 = sphi 0, %s18
    %s21 = sphi 0, %s19
    %s31 = sphi 0, %s33
    %s34 = sphi 0, %s31
    %s35 = sphi 0, %s34
    %s51 = sphi 0, %s35
    %s57 = sphi 0, %s59
    %s60 = sphi 0, %s57
    %s61 = sphi 0, %s60
    %s77 = sphi 0, %s61
    %s83 = sphi 0, %s85
    %s86 = sphi 0, %s83
    %s87 = sphi 0, %s86
    %s103 = sphi 0, %s87
    %s111 = sphi 0, %s113
    %s114 = sphi 0, %s111
    %s115 = sphi 0, %s114
    %s131 = sphi 0, %s115
  $region4: #{_matmul_impl.1} parent=0 // loop_header_branch
    %12 = sbr.rel (%p10) target = $region8
  $region5: #{_matmul_impl.1} parent=0 // loop_body
    %s14 = ssub.s32 %s9, 1
    %s15 = ssub.s32 %s9, 2
    %s22 = sadd.s32 1, %s17
    %p23 = scmp.ge.s32.totalorder %s22, 1
    %s24 = scalar_select %p23, 0, %s22
    %s25 = sadd.s32 1, %s16
    %s26 = scalar_select %p23, %s25, %s16
    %p27 = scmp.ge.s32.totalorder %s26, 16
    %s28 = scalar_select %p27, 0, %s26
    %s29 = ssub.s32 %s16, %s28
    %p30 = scmp.eq.s32.totalorder %s29, 0
    %s32 = sadd.s32 %s31, 1
    %s33 = scalar_select %p30, %s31, %s32
    %p36 = pneg %p30
    %p37 = scmp.eq.s32.totalorder %s9, 15
    %p38 = por %p36, %p37
    %p39 = scmp.ne.s32.totalorder %s31, %s34
    %p40 = scmp.eq.s32.totalorder %s9, 0
    %p41 = por %p39, %p40
    %p42 = scmp.ne.s32.totalorder %s31, %s34
    %p43 = scmp.eq.s32.totalorder %s14, 15
    %p44 = por %p42, %p43
    %p45 = scmp.ne.s32.totalorder %s34, %s35
    %p46 = scmp.eq.s32.totalorder %s14, 0
    %p47 = por %p45, %p46
    %p48 = scmp.ne.s32.totalorder %s34, %s35
    %p49 = scmp.eq.s32.totalorder %s15, 15
    %p50 = por %p48, %p49
    %p52 = scmp.ne.s32.totalorder %s35, %s51
    %p53 = scmp.eq.s32.totalorder %s15, 0
    %p54 = por %p52, %p53
    %s55 = ssub.s32 %s17, %s24
    %p56 = scmp.eq.s32.totalorder %s55, 0
    %s58 = sadd.s32 %s57, 1
    %s59 = scalar_select %p56, %s57, %s58
    %p62 = pneg %p56
    %p63 = scmp.eq.s32.totalorder %s9, 15
    %p64 = por %p62, %p63
    %p65 = scmp.ne.s32.totalorder %s57, %s60
    %p66 = scmp.eq.s32.totalorder %s9, 0
    %p67 = por %p65, %p66
    %p68 = scmp.ne.s32.totalorder %s57, %s60
    %p69 = scmp.eq.s32.totalorder %s14, 15
    %p70 = por %p68, %p69
    %p71 = scmp.ne.s32.totalorder %s60, %s61
    %p72 = scmp.eq.s32.totalorder %s14, 0
    %p73 = por %p71, %p72
    %p74 = scmp.ne.s32.totalorder %s60, %s61
    %p75 = scmp.eq.s32.totalorder %s15, 15
    %p76 = por %p74, %p75
    %p78 = scmp.ne.s32.totalorder %s61, %s77
    %p79 = scmp.eq.s32.totalorder %s15, 0
    %p80 = por %p78, %p79
    %s81 = ssub.s32 %s17, %s24
    %p82 = scmp.eq.s32.totalorder %s81, 0
    %s84 = sadd.s32 %s83, 1
    %s85 = scalar_select %p82, %s83, %s84
    %p88 = pneg %p82
    %p89 = scmp.eq.s32.totalorder %s9, 15
    %p90 = por %p88, %p89
    %p91 = scmp.ne.s32.totalorder %s83, %s86
    %p92 = scmp.eq.s32.totalorder %s9, 0
    %p93 = por %p91, %p92
    %p94 = scmp.ne.s32.totalorder %s83, %s86
    %p95 = scmp.eq.s32.totalorder %s14, 15
    %p96 = por %p94, %p95
    %p97 = scmp.ne.s32.totalorder %s86, %s87
    %p98 = scmp.eq.s32.totalorder %s14, 0
    %p99 = por %p97, %p98
    %p100 = scmp.ne.s32.totalorder %s86, %s87
    %p101 = scmp.eq.s32.totalorder %s15, 15
    %p102 = por %p100, %p101
    %p104 = scmp.ne.s32.totalorder %s87, %s103
    %p105 = scmp.eq.s32.totalorder %s15, 0
    %p106 = por %p104, %p105
    %s107 = ssub.s32 %s16, %s28
    %s108 = ssub.s32 %s17, %s24
    %s109 = sor.u32 %s107, %s108
    %p110 = scmp.eq.s32.totalorder %s109, 0
    %s112 = sadd.s32 %s111, 1
    %s113 = scalar_select %p110, %s111, %s112
    %p116 = pneg %p110
    %p117 = scmp.eq.s32.totalorder %s9, 15
    %p118 = por %p116, %p117
    %p119 = scmp.ne.s32.totalorder %s111, %s114
    %p120 = scmp.eq.s32.totalorder %s9, 0
    %p121 = por %p119, %p120
    %p122 = scmp.ne.s32.totalorder %s111, %s114
    %p123 = scmp.eq.s32.totalorder %s14, 15
    %p124 = por %p122, %p123
    %p125 = scmp.ne.s32.totalorder %s114, %s115
    %p126 = scmp.eq.s32.totalorder %s14, 0
    %p127 = por %p125, %p126
    %p128 = scmp.ne.s32.totalorder %s114, %s115
    %p129 = scmp.eq.s32.totalorder %s15, 15
    %p130 = por %p128, %p129
    %p132 = scmp.ne.s32.totalorder %s115, %s131
    %p133 = scmp.eq.s32.totalorder %s15, 0
    %p134 = por %p132, %p133
    %p135 = scmp.le.s32.totalorder 1, %s9
    %p136 = scmp.lt.s32.totalorder %s9, 17
    %p137 = pnand %p135, %p136
    %p138 = pneg %p137
    // Predicated region
    $region9: #{_matmul_impl.1} parent=5 // pred_check
      _
    $region10: #{_matmul_impl.1} parent=5 // pred_check_branch
      %140 = sbr.rel (%p137) target = $region12
    $region11: #{_matmul_impl.1} parent=5 // pred_region
      %s141 = ssub.s32 %s9, 1
      // Predicated region
      $region13: #{_matmul_impl.1} parent=11 // pred_check
        %p142 = pneg %p73
      $region14: #{_matmul_impl.1} parent=11 // pred_check_branch
        %144 = sbr.rel (%p142) target = $region16
      $region15: #{_matmul_impl.1} parent=11 // pred_region
        %p145 = scmp.lt.s32.totalorder %s19, 0
        %s146 = scalar_select %p145, %s19, 0
        %s147 = smul.addr %s146, 4
        %s148 = scalar_lea.vmem %s1, %s147
      $region16: #{_matmul_impl.1} parent=11 // pred_fallthru
        _
      // Predicated region
      $region17: #{_matmul_impl.1} parent=11 // pred_check
        %p149 = pneg %p99
      $region18: #{_matmul_impl.1} parent=11 // pred_check_branch
        %151 = sbr.rel (%p149) target = $region20
      $region19: #{_matmul_impl.1} parent=11 // pred_region
        %p152 = scmp.lt.s32.totalorder %s19, 0
        %s153 = scalar_select %p152, %s19, 0
        %s154 = scalar_lea.vmem %s2, %s153
      $region20: #{_matmul_impl.1} parent=11 // pred_fallthru
        _
    $region12: #{_matmul_impl.1} parent=5 // pred_fallthru
      _
    %p155 = scmp.lt.s32.totalorder %s9, 16
    // Predicated region
    $region21: #{_matmul_impl.1} parent=5 // pred_check
      %p156 = pneg %p155
    $region22: #{_matmul_impl.1} parent=5 // pred_check_branch
      %158 = sbr.rel (%p156) target = $region24
    $region23: #{_matmul_impl.1} parent=5 // pred_region
      // Predicated region
      $region25: #{_matmul_impl.1} parent=23 // pred_check
        %p159 = pneg %p41
      $region26: #{_matmul_impl.1} parent=23 // pred_check_branch
        %161 = sbr.rel (%p159) target = $region28
      $region27: #{_matmul_impl.1} parent=23 // pred_region
        %s162 = smul.u32 128, %s16
        %p163 = scmp.lt.s32.totalorder %s162, 2047
        %s164 = scalar_select %p163, %s162, 2047
        %s165 = smul.addr %s164, 4
        %s166 = scalar_lea.vmem %s0, %s165
        %s167 = smul.u32 128, %s16
      $region28: #{_matmul_impl.1} parent=23 // pred_fallthru
        _
    $region24: #{_matmul_impl.1} parent=5 // pred_fallthru
      _
    %p168 = scmp.le.s32.totalorder 1, %s9
    %p169 = scmp.lt.s32.totalorder %s9, 17
    %p170 = pnand %p168, %p169
    %p171 = pneg %p170
    // Predicated region
    $region29: #{_matmul_impl.1} parent=5 // pred_check
      _
    $region30: #{_matmul_impl.1} parent=5 // pred_check_branch
      %173 = sbr.rel (%p170) target = $region32
    $region31: #{_matmul_impl.1} parent=5 // pred_region
      %s174 = ssub.s32 %s9, 1
      %s175 = smul.u32 128, %s18
      %p176 = scmp.lt.s32.totalorder %s175, 2047
      %s177 = scalar_select %p176, %s175, 2047
      %s178 = smul.addr %s177, 4
      %s179 = scalar_lea.vmem %s0, %s178
      %p180 = pneg %p47
      %p181 = pneg %p44
      %p182 = scmp.lt.s32.totalorder %s19, 0
      %s183 = scalar_select %p182, %s19, 0
      %s184 = smul.addr %s183, 4
      %s185 = scalar_lea.vmem %s1, %s184
      %p186 = pneg %p73
      %p187 = pneg %p70
      %p188 = scmp.lt.s32.totalorder %s19, 0
      %s189 = scalar_select %p188, %s19, 0
      %s190 = scalar_lea.vmem %s2, %s189
      %p191 = pneg %p99
      %p192 = pneg %p96
      %p193 = pneg %p127
      %p194 = pneg %p124
      %s195 = smul.u32 128, %s18
      %p196 = scmp.lt.s32.totalorder %s195, 2047
      %s197 = scalar_select %p196, %s195, 2047
      %p198 = scmp.lt.s32.totalorder %s19, 0
      %s199 = scalar_select %p198, %s19, 0
      %s200 = sadd.s32 %s199, %s197
      %s201 = smul.addr %s200, 4
      %s202 = scalar_lea.vmem %s3, %s201
      %s203 = smul.u32 128, %s18
      %p204 = scmp.lt.s32.totalorder %s203, 2047
      %s205 = scalar_select %p204, %s203, 2047
      %s206 = smul.addr %s205, 4
      %s207 = scalar_lea.vmem %s0, %s206
      %s208 = smul.u32 128, %s18
      %p209 = scmp.lt.s32.totalorder %s19, 0
      %s210 = scalar_select %p209, %s19, 0
      %s211 = smul.addr %s210, 4
      %s212 = scalar_lea.vmem %s1, %s211
      %p213 = scmp.lt.s32.totalorder %s19, 0
      %s214 = scalar_select %p213, %s19, 0
      %s215 = scalar_lea.vmem %s2, %s214
      %s216 = smul.u32 128, %s18
      %p217 = scmp.lt.s32.totalorder %s216, 2047
      %s218 = scalar_select %p217, %s216, 2047
      %p219 = scmp.lt.s32.totalorder %s19, 0
      %s220 = scalar_select %p219, %s19, 0
      %s221 = sadd.s32 %s220, %s218
      %s222 = smul.addr %s221, 4
      %s223 = scalar_lea.vmem %s3, %s222
      %s224 = smul.u32 128, %s18
      %v226 = vld [vmem:[%s207] sm:$0xf]
      %v227 = vld [vmem:[%s207 + $0x4] sm:$0xf]
      %v228 = vld [vmem:[%s207 + $0x8] sm:$0xf]
      %v229 = vld [vmem:[%s207 + $0xc] sm:$0xf]
      %v230 = vld [vmem:[%s207 + $0x10] sm:$0xf]
      %v231 = vld [vmem:[%s207 + $0x14] sm:$0xf]
      %v232 = vld [vmem:[%s207 + $0x18] sm:$0xf]
      %v233 = vld [vmem:[%s207 + $0x1c] sm:$0xf]
      %v234 = vld [vmem:[%s207 + $0x20] sm:$0xf]
      %v235 = vld [vmem:[%s207 + $0x24] sm:$0xf]
      %v236 = vld [vmem:[%s207 + $0x28] sm:$0xf]
      %v237 = vld [vmem:[%s207 + $0x2c] sm:$0xf]
      %v238 = vld [vmem:[%s207 + $0x30] sm:$0xf]
      %v239 = vld [vmem:[%s207 + $0x34] sm:$0xf]
      %v240 = vld [vmem:[%s207 + $0x38] sm:$0xf]
      %v241 = vld [vmem:[%s207 + $0x3c] sm:$0xf]
      %v242 = vld [vmem:[%s207 + $0x40] sm:$0xf]
      %v243 = vld [vmem:[%s207 + $0x44] sm:$0xf]
      %v244 = vld [vmem:[%s207 + $0x48] sm:$0xf]
      %v245 = vld [vmem:[%s207 + $0x4c] sm:$0xf]
      %v246 = vld [vmem:[%s207 + $0x50] sm:$0xf]
      %v247 = vld [vmem:[%s207 + $0x54] sm:$0xf]
      %v248 = vld [vmem:[%s207 + $0x58] sm:$0xf]
      %v249 = vld [vmem:[%s207 + $0x5c] sm:$0xf]
      %v250 = vld [vmem:[%s207 + $0x60] sm:$0xf]
      %v251 = vld [vmem:[%s207 + $0x64] sm:$0xf]
      %v252 = vld [vmem:[%s207 + $0x68] sm:$0xf]
      %v253 = vld [vmem:[%s207 + $0x6c] sm:$0xf]
      %v254 = vld [vmem:[%s207 + $0x70] sm:$0xf]
      %v255 = vld [vmem:[%s207 + $0x74] sm:$0xf]
      %v256 = vld [vmem:[%s207 + $0x78] sm:$0xf]
      %v257 = vld [vmem:[%s207 + $0x7c] sm:$0xf]
      %v258 = vld [vmem:[%s207 + $0x80] sm:$0xf]
      %v259 = vld [vmem:[%s207 + $0x84] sm:$0xf]
      %v260 = vld [vmem:[%s207 + $0x88] sm:$0xf]
      %v261 = vld [vmem:[%s207 + $0x8c] sm:$0xf]
      %v262 = vld [vmem:[%s207 + $0x90] sm:$0xf]
      %v263 = vld [vmem:[%s207 + $0x94] sm:$0xf]
      %v264 = vld [vmem:[%s207 + $0x98] sm:$0xf]
      %v265 = vld [vmem:[%s207 + $0x9c] sm:$0xf]
      %v266 = vld [vmem:[%s207 + $0xa0] sm:$0xf]
      %v267 = vld [vmem:[%s207 + $0xa4] sm:$0xf]
      %v268 = vld [vmem:[%s207 + $0xa8] sm:$0xf]
      %v269 = vld [vmem:[%s207 + $0xac] sm:$0xf]
      %v270 = vld [vmem:[%s207 + $0xb0] sm:$0xf]
      %v271 = vld [vmem:[%s207 + $0xb4] sm:$0xf]
      %v272 = vld [vmem:[%s207 + $0xb8] sm:$0xf]
      %v273 = vld [vmem:[%s207 + $0xbc] sm:$0xf]
      %v274 = vld [vmem:[%s207 + $0xc0] sm:$0xf]
      %v275 = vld [vmem:[%s207 + $0xc4] sm:$0xf]
      %v276 = vld [vmem:[%s207 + $0xc8] sm:$0xf]
      %v277 = vld [vmem:[%s207 + $0xcc] sm:$0xf]
      %v278 = vld [vmem:[%s207 + $0xd0] sm:$0xf]
      %v279 = vld [vmem:[%s207 + $0xd4] sm:$0xf]
      %v280 = vld [vmem:[%s207 + $0xd8] sm:$0xf]
      %v281 = vld [vmem:[%s207 + $0xdc] sm:$0xf]
      %v282 = vld [vmem:[%s207 + $0xe0] sm:$0xf]
      %v283 = vld [vmem:[%s207 + $0xe4] sm:$0xf]
      %v284 = vld [vmem:[%s207 + $0xe8] sm:$0xf]
      %v285 = vld [vmem:[%s207 + $0xec] sm:$0xf]
      %v286 = vld [vmem:[%s207 + $0xf0] sm:$0xf]
      %v287 = vld [vmem:[%s207 + $0xf4] sm:$0xf]
      %v288 = vld [vmem:[%s207 + $0xf8] sm:$0xf]
      %v289 = vld [vmem:[%s207 + $0xfc] sm:$0xf]
      %v290 = vld [vmem:[%s207 + $0x100] sm:$0xf]
      %v291 = vld [vmem:[%s207 + $0x104] sm:$0xf]
      %v292 = vld [vmem:[%s207 + $0x108] sm:$0xf]
      %v293 = vld [vmem:[%s207 + $0x10c] sm:$0xf]
      %v294 = vld [vmem:[%s207 + $0x110] sm:$0xf]
      %v295 = vld [vmem:[%s207 + $0x114] sm:$0xf]
      %v296 = vld [vmem:[%s207 + $0x118] sm:$0xf]
      %v297 = vld [vmem:[%s207 + $0x11c] sm:$0xf]
      %v298 = vld [vmem:[%s207 + $0x120] sm:$0xf]
      %v299 = vld [vmem:[%s207 + $0x124] sm:$0xf]
      %v300 = vld [vmem:[%s207 + $0x128] sm:$0xf]
      %v301 = vld [vmem:[%s207 + $0x12c] sm:$0xf]
      %v302 = vld [vmem:[%s207 + $0x130] sm:$0xf]
      %v303 = vld [vmem:[%s207 + $0x134] sm:$0xf]
      %v304 = vld [vmem:[%s207 + $0x138] sm:$0xf]
      %v305 = vld [vmem:[%s207 + $0x13c] sm:$0xf]
      %v306 = vld [vmem:[%s207 + $0x140] sm:$0xf]
      %v307 = vld [vmem:[%s207 + $0x144] sm:$0xf]
      %v308 = vld [vmem:[%s207 + $0x148] sm:$0xf]
      %v309 = vld [vmem:[%s207 + $0x14c] sm:$0xf]
      %v310 = vld [vmem:[%s207 + $0x150] sm:$0xf]
      %v311 = vld [vmem:[%s207 + $0x154] sm:$0xf]
      %v312 = vld [vmem:[%s207 + $0x158] sm:$0xf]
      %v313 = vld [vmem:[%s207 + $0x15c] sm:$0xf]
      %v314 = vld [vmem:[%s207 + $0x160] sm:$0xf]
      %v315 = vld [vmem:[%s207 + $0x164] sm:$0xf]
      %v316 = vld [vmem:[%s207 + $0x168] sm:$0xf]
      %v317 = vld [vmem:[%s207 + $0x16c] sm:$0xf]
      %v318 = vld [vmem:[%s207 + $0x170] sm:$0xf]
      %v319 = vld [vmem:[%s207 + $0x174] sm:$0xf]
      %v320 = vld [vmem:[%s207 + $0x178] sm:$0xf]
      %v321 = vld [vmem:[%s207 + $0x17c] sm:$0xf]
      %v322 = vld [vmem:[%s207 + $0x180] sm:$0xf]
      %v323 = vld [vmem:[%s207 + $0x184] sm:$0xf]
      %v324 = vld [vmem:[%s207 + $0x188] sm:$0xf]
      %v325 = vld [vmem:[%s207 + $0x18c] sm:$0xf]
      %v326 = vld [vmem:[%s207 + $0x190] sm:$0xf]
      %v327 = vld [vmem:[%s207 + $0x194] sm:$0xf]
      %v328 = vld [vmem:[%s207 + $0x198] sm:$0xf]
      %v329 = vld [vmem:[%s207 + $0x19c] sm:$0xf]
      %v330 = vld [vmem:[%s207 + $0x1a0] sm:$0xf]
      %v331 = vld [vmem:[%s207 + $0x1a4] sm:$0xf]
      %v332 = vld [vmem:[%s207 + $0x1a8] sm:$0xf]
      %v333 = vld [vmem:[%s207 + $0x1ac] sm:$0xf]
      %v334 = vld [vmem:[%s207 + $0x1b0] sm:$0xf]
      %v335 = vld [vmem:[%s207 + $0x1b4] sm:$0xf]
      %v336 = vld [vmem:[%s207 + $0x1b8] sm:$0xf]
      %v337 = vld [vmem:[%s207 + $0x1bc] sm:$0xf]
      %v338 = vld [vmem:[%s207 + $0x1c0] sm:$0xf]
      %v339 = vld [vmem:[%s207 + $0x1c4] sm:$0xf]
      %v340 = vld [vmem:[%s207 + $0x1c8] sm:$0xf]
      %v341 = vld [vmem:[%s207 + $0x1cc] sm:$0xf]
      %v342 = vld [vmem:[%s207 + $0x1d0] sm:$0xf]
      %v343 = vld [vmem:[%s207 + $0x1d4] sm:$0xf]
      %v344 = vld [vmem:[%s207 + $0x1d8] sm:$0xf]
      %v345 = vld [vmem:[%s207 + $0x1dc] sm:$0xf]
      %v346 = vld [vmem:[%s207 + $0x1e0] sm:$0xf]
      %v347 = vld [vmem:[%s207 + $0x1e4] sm:$0xf]
      %v348 = vld [vmem:[%s207 + $0x1e8] sm:$0xf]
      %v349 = vld [vmem:[%s207 + $0x1ec] sm:$0xf]
      %v350 = vld [vmem:[%s207 + $0x1f0] sm:$0xf]
      %v351 = vld [vmem:[%s207 + $0x1f4] sm:$0xf]
      %v352 = vld [vmem:[%s207 + $0x1f8] sm:$0xf]
      %v353 = vld [vmem:[%s207 + $0x1fc] sm:$0xf]
      %v354 = vld [vmem:[%s212] sm:$0xf]
      %v355 = vld [vmem:[%s212 + $0x4] sm:$0xf]
      %v356 = vld [vmem:[%s212 + $0x8] sm:$0xf]
      %v357 = vld [vmem:[%s212 + $0xc] sm:$0xf]
      %v358 = vld [vmem:[%s212 + $0x10] sm:$0xf]
      %v359 = vld [vmem:[%s212 + $0x14] sm:$0xf]
      %v360 = vld [vmem:[%s212 + $0x18] sm:$0xf]
      %v361 = vld [vmem:[%s212 + $0x1c] sm:$0xf]
      %v362 = vld [vmem:[%s212 + $0x20] sm:$0xf]
      %v363 = vld [vmem:[%s212 + $0x24] sm:$0xf]
      %v364 = vld [vmem:[%s212 + $0x28] sm:$0xf]
      %v365 = vld [vmem:[%s212 + $0x2c] sm:$0xf]
      %v366 = vld [vmem:[%s212 + $0x30] sm:$0xf]
      %v367 = vld [vmem:[%s212 + $0x34] sm:$0xf]
      %v368 = vld [vmem:[%s212 + $0x38] sm:$0xf]
      %v369 = vld [vmem:[%s212 + $0x3c] sm:$0xf]
      %v370 = vld [vmem:[%s215] sm:$0x1]
      %v372 = vlaneseq
      %v373 = vshrl.u32 %v372, 7
      %v374 = vsub.s32 0, %v373
      %v375 = vrot.slane %v370, %v374
      %v505 = vunpack.c.l.b16 %v226
      %v506 = vunpack.c.l.b16 %v227
      %v507 = vunpack.c.l.b16 %v228
      %v508 = vunpack.c.l.b16 %v229
      %v509 = vunpack.c.l.b16 %v230
      %v510 = vunpack.c.l.b16 %v231
      %v511 = vunpack.c.l.b16 %v232
      %v512 = vunpack.c.l.b16 %v233
      %v513 = vunpack.c.l.b16 %v234
      %v514 = vunpack.c.l.b16 %v235
      %v515 = vunpack.c.l.b16 %v236
      %v516 = vunpack.c.l.b16 %v237
      %v517 = vunpack.c.l.b16 %v238
      %v518 = vunpack.c.l.b16 %v239
      %v519 = vunpack.c.l.b16 %v240
      %v520 = vunpack.c.l.b16 %v241
      %v521 = vunpack.c.l.b16 %v242
      %v522 = vunpack.c.l.b16 %v243
      %v523 = vunpack.c.l.b16 %v244
      %v524 = vunpack.c.l.b16 %v245
      %v525 = vunpack.c.l.b16 %v246
      %v526 = vunpack.c.l.b16 %v247
      %v527 = vunpack.c.l.b16 %v248
      %v528 = vunpack.c.l.b16 %v249
      %v529 = vunpack.c.l.b16 %v250
      %v530 = vunpack.c.l.b16 %v251
      %v531 = vunpack.c.l.b16 %v252
      %v532 = vunpack.c.l.b16 %v253
      %v533 = vunpack.c.l.b16 %v254
      %v534 = vunpack.c.l.b16 %v255
      %v535 = vunpack.c.l.b16 %v256
      %v536 = vunpack.c.l.b16 %v257
      %v537 = vunpack.c.l.b16 %v258
      %v538 = vunpack.c.l.b16 %v259
      %v539 = vunpack.c.l.b16 %v260
      %v540 = vunpack.c.l.b16 %v261
      %v541 = vunpack.c.l.b16 %v262
      %v542 = vunpack.c.l.b16 %v263
      %v543 = vunpack.c.l.b16 %v264
      %v544 = vunpack.c.l.b16 %v265
      %v545 = vunpack.c.l.b16 %v266
      %v546 = vunpack.c.l.b16 %v267
      %v547 = vunpack.c.l.b16 %v268
      %v548 = vunpack.c.l.b16 %v269
      %v549 = vunpack.c.l.b16 %v270
      %v550 = vunpack.c.l.b16 %v271
      %v551 = vunpack.c.l.b16 %v272
      %v552 = vunpack.c.l.b16 %v273
      %v553 = vunpack.c.l.b16 %v274
      %v554 = vunpack.c.l.b16 %v275
      %v555 = vunpack.c.l.b16 %v276
      %v556 = vunpack.c.l.b16 %v277
      %v557 = vunpack.c.l.b16 %v278
      %v558 = vunpack.c.l.b16 %v279
      %v559 = vunpack.c.l.b16 %v280
      %v560 = vunpack.c.l.b16 %v281
      %v561 = vunpack.c.l.b16 %v282
      %v562 = vunpack.c.l.b16 %v283
      %v563 = vunpack.c.l.b16 %v284
      %v564 = vunpack.c.l.b16 %v285
      %v565 = vunpack.c.l.b16 %v286
      %v566 = vunpack.c.l.b16 %v287
      %v567 = vunpack.c.l.b16 %v288
      %v568 = vunpack.c.l.b16 %v289
      %v569 = vunpack.c.l.b16 %v290
      %v570 = vunpack.c.l.b16 %v291
      %v571 = vunpack.c.l.b16 %v292
      %v572 = vunpack.c.l.b16 %v293
      %v573 = vunpack.c.l.b16 %v294
      %v574 = vunpack.c.l.b16 %v295
      %v575 = vunpack.c.l.b16 %v296
      %v576 = vunpack.c.l.b16 %v297
      %v577 = vunpack.c.l.b16 %v298
      %v578 = vunpack.c.l.b16 %v299
      %v579 = vunpack.c.l.b16 %v300
      %v580 = vunpack.c.l.b16 %v301
      %v581 = vunpack.c.l.b16 %v302
      %v582 = vunpack.c.l.b16 %v303
      %v583 = vunpack.c.l.b16 %v304
      %v584 = vunpack.c.l.b16 %v305
      %v585 = vunpack.c.l.b16 %v306
      %v586 = vunpack.c.l.b16 %v307
      %v587 = vunpack.c.l.b16 %v308
      %v588 = vunpack.c.l.b16 %v309
      %v589 = vunpack.c.l.b16 %v310
      %v590 = vunpack.c.l.b16 %v311
      %v591 = vunpack.c.l.b16 %v312
      %v592 = vunpack.c.l.b16 %v313
      %v593 = vunpack.c.l.b16 %v314
      %v594 = vunpack.c.l.b16 %v315
      %v595 = vunpack.c.l.b16 %v316
      %v596 = vunpack.c.l.b16 %v317
      %v597 = vunpack.c.l.b16 %v318
      %v598 = vunpack.c.l.b16 %v319
      %v599 = vunpack.c.l.b16 %v320
      %v600 = vunpack.c.l.b16 %v321
      %v601 = vunpack.c.l.b16 %v322
      %v602 = vunpack.c.l.b16 %v323
      %v603 = vunpack.c.l.b16 %v324
      %v604 = vunpack.c.l.b16 %v325
      %v605 = vunpack.c.l.b16 %v326
      %v606 = vunpack.c.l.b16 %v327
      %v607 = vunpack.c.l.b16 %v328
      %v608 = vunpack.c.l.b16 %v329
      %v609 = vunpack.c.l.b16 %v330
      %v610 = vunpack.c.l.b16 %v331
      %v611 = vunpack.c.l.b16 %v332
      %v612 = vunpack.c.l.b16 %v333
      %v613 = vunpack.c.l.b16 %v334
      %v614 = vunpack.c.l.b16 %v335
      %v615 = vunpack.c.l.b16 %v336
      %v616 = vunpack.c.l.b16 %v337
      %v617 = vunpack.c.l.b16 %v338
      %v618 = vunpack.c.l.b16 %v339
      %v619 = vunpack.c.l.b16 %v340
      %v620 = vunpack.c.l.b16 %v341
      %v621 = vunpack.c.l.b16 %v342
      %v622 = vunpack.c.l.b16 %v343
      %v623 = vunpack.c.l.b16 %v344
      %v624 = vunpack.c.l.b16 %v345
      %v625 = vunpack.c.l.b16 %v346
      %v626 = vunpack.c.l.b16 %v347
      %v627 = vunpack.c.l.b16 %v348
      %v628 = vunpack.c.l.b16 %v349
      %v629 = vunpack.c.l.b16 %v350
      %v630 = vunpack.c.l.b16 %v351
      %v631 = vunpack.c.l.b16 %v352
      %v632 = vunpack.c.l.b16 %v353
      %v633 = vpack.c.b16 %v506, %v505
      %v634 = vpack.c.b16 %v508, %v507
      %v635 = vpack.c.b16 %v510, %v509
      %v636 = vpack.c.b16 %v512, %v511
      %v637 = vpack.c.b16 %v514, %v513
      %v638 = vpack.c.b16 %v516, %v515
      %v639 = vpack.c.b16 %v518, %v517
      %v640 = vpack.c.b16 %v520, %v519
      %v641 = vpack.c.b16 %v522, %v521
      %v642 = vpack.c.b16 %v524, %v523
      %v643 = vpack.c.b16 %v526, %v525
      %v644 = vpack.c.b16 %v528, %v527
      %v645 = vpack.c.b16 %v530, %v529
      %v646 = vpack.c.b16 %v532, %v531
      %v647 = vpack.c.b16 %v534, %v533
      %v648 = vpack.c.b16 %v536, %v535
      %v649 = vpack.c.b16 %v538, %v537
      %v650 = vpack.c.b16 %v540, %v539
      %v651 = vpack.c.b16 %v542, %v541
      %v652 = vpack.c.b16 %v544, %v543
      %v653 = vpack.c.b16 %v546, %v545
      %v654 = vpack.c.b16 %v548, %v547
      %v655 = vpack.c.b16 %v550, %v549
      %v656 = vpack.c.b16 %v552, %v551
      %v657 = vpack.c.b16 %v554, %v553
      %v658 = vpack.c.b16 %v556, %v555
      %v659 = vpack.c.b16 %v558, %v557
      %v660 = vpack.c.b16 %v560, %v559
      %v661 = vpack.c.b16 %v562, %v561
      %v662 = vpack.c.b16 %v564, %v563
      %v663 = vpack.c.b16 %v566, %v565
      %v664 = vpack.c.b16 %v568, %v567
      %v665 = vpack.c.b16 %v570, %v569
      %v666 = vpack.c.b16 %v572, %v571
      %v667 = vpack.c.b16 %v574, %v573
      %v668 = vpack.c.b16 %v576, %v575
      %v669 = vpack.c.b16 %v578, %v577
      %v670 = vpack.c.b16 %v580, %v579
      %v671 = vpack.c.b16 %v582, %v581
      %v672 = vpack.c.b16 %v584, %v583
      %v673 = vpack.c.b16 %v586, %v585
      %v674 = vpack.c.b16 %v588, %v587
      %v675 = vpack.c.b16 %v590, %v589
      %v676 = vpack.c.b16 %v592, %v591
      %v677 = vpack.c.b16 %v594, %v593
      %v678 = vpack.c.b16 %v596, %v595
      %v679 = vpack.c.b16 %v598, %v597
      %v680 = vpack.c.b16 %v600, %v599
      %v681 = vpack.c.b16 %v602, %v601
      %v682 = vpack.c.b16 %v604, %v603
      %v683 = vpack.c.b16 %v606, %v605
      %v684 = vpack.c.b16 %v608, %v607
      %v685 = vpack.c.b16 %v610, %v609
      %v686 = vpack.c.b16 %v612, %v611
      %v687 = vpack.c.b16 %v614, %v613
      %v688 = vpack.c.b16 %v616, %v615
      %v689 = vpack.c.b16 %v618, %v617
      %v690 = vpack.c.b16 %v620, %v619
      %v691 = vpack.c.b16 %v622, %v621
      %v692 = vpack.c.b16 %v624, %v623
      %v693 = vpack.c.b16 %v626, %v625
      %v694 = vpack.c.b16 %v628, %v627
      %v695 = vpack.c.b16 %v630, %v629
      %v696 = vpack.c.b16 %v632, %v631
      %v777 = vunpack.c.l.b16 %v354
      %v778 = vunpack.c.l.b16 %v355
      %v779 = vunpack.c.l.b16 %v356
      %v780 = vunpack.c.l.b16 %v357
      %v781 = vunpack.c.l.b16 %v358
      %v782 = vunpack.c.l.b16 %v359
      %v783 = vunpack.c.l.b16 %v360
      %v784 = vunpack.c.l.b16 %v361
      %v785 = vunpack.c.l.b16 %v362
      %v786 = vunpack.c.l.b16 %v363
      %v787 = vunpack.c.l.b16 %v364
      %v788 = vunpack.c.l.b16 %v365
      %v789 = vunpack.c.l.b16 %v366
      %v790 = vunpack.c.l.b16 %v367
      %v791 = vunpack.c.l.b16 %v368
      %v792 = vunpack.c.l.b16 %v369
      %v793 = vpack.c.b16 %v778, %v777
      %v794 = vpack.c.b16 %v780, %v779
      %v795 = vpack.c.b16 %v782, %v781
      %v796 = vpack.c.b16 %v784, %v783
      %v797 = vpack.c.b16 %v786, %v785
      %v798 = vpack.c.b16 %v788, %v787
      %v799 = vpack.c.b16 %v790, %v789
      %v800 = vpack.c.b16 %v792, %v791
      %809 = vmatprep.subr.bf16.mxu0 0
      %810 = vmatpush1.bf16.msra.mxu0 %v800
      %811 = vmatprep.subr.bf16.mxu0 0
      %812 = vmatpush1.bf16.msra.mxu0 %v799
      %813 = vmatprep.subr.bf16.mxu0 0
      %814 = vmatpush1.bf16.msra.mxu0 %v798
      %815 = vmatprep.subr.bf16.mxu0 0
      %816 = vmatpush1.bf16.msra.mxu0 %v797
      %817 = vmatprep.subr.bf16.mxu0 0
      %818 = vmatpush1.bf16.msra.mxu0 %v796
      %819 = vmatprep.subr.bf16.mxu0 0
      %820 = vmatpush1.bf16.msra.mxu0 %v795
      %821 = vmatprep.subr.bf16.mxu0 0
      %822 = vmatpush1.bf16.msra.mxu0 %v794
      %823 = vmatprep.subr.bf16.mxu0 0
      %824 = vmatpush1.bf16.msra.mxu0 %v793
      %825 = vmatprep.subr.bf16.mxu0 0
      %826 = vmatpush2.bf16.msra.mxu0 0
      %827 = vmatprep.subr.bf16.mxu0 0
      %828 = vmatpush2.bf16.msra.mxu0 0
      %829 = vmatprep.subr.bf16.mxu0 0
      %830 = vmatpush2.bf16.msra.mxu0 0
      %831 = vmatprep.subr.bf16.mxu0 0
      %832 = vmatpush2.bf16.msra.mxu0 0
      %833 = vmatprep.subr.bf16.mxu0 0
      %834 = vmatpush2.bf16.msra.mxu0 0
      %835 = vmatprep.subr.bf16.mxu0 0
      %836 = vmatpush2.bf16.msra.mxu0 0
      %837 = vmatprep.subr.bf16.mxu0 0
      %838 = vmatpush2.bf16.msra.mxu0 0
      %839 = vmatprep.subr.bf16.mxu0 0
      %840 = vmatpush2.bf16.msra.mxu0 0
      %841 = vmatprep.mubr.bf16.mxu0 0
      %842 = vmatmul.mubr.bf16.gmra.mxu0 %v633
      %v843 = vpop.f32.mrf.mxu0
      %v844 = vadd.f32 %v375, %v843
      %v845 = vpop.f32.mrf.mxu0
      %v846 = vpop.f32.mrf.mxu0
      %v847 = vadd.f32 %v375, %v846
      %v848 = vpop.f32.mrf.mxu0
      %849 = vmatprep.mubr.bf16.mxu0 0
      %850 = vmatmul.mubr.bf16.gmra.mxu0 %v634
      %v851 = vpop.f32.mrf.mxu0
      %v852 = vadd.f32 %v375, %v851
      %v853 = vpop.f32.mrf.mxu0
      %v854 = vpop.f32.mrf.mxu0
      %v855 = vadd.f32 %v375, %v854
      %v856 = vpop.f32.mrf.mxu0
      %857 = vmatprep.mubr.bf16.mxu0 0
      %858 = vmatmul.mubr.bf16.gmra.mxu0 %v635
      %v859 = vpop.f32.mrf.mxu0
      %v860 = vadd.f32 %v375, %v859
      %v861 = vpop.f32.mrf.mxu0
      %v862 = vpop.f32.mrf.mxu0
      %v863 = vadd.f32 %v375, %v862
      %v864 = vpop.f32.mrf.mxu0
      %865 = vmatprep.mubr.bf16.mxu0 0
      %866 = vmatmul.mubr.bf16.gmra.mxu0 %v636
      %v867 = vpop.f32.mrf.mxu0
      %v868 = vadd.f32 %v375, %v867
      %v869 = vpop.f32.mrf.mxu0
      %v870 = vpop.f32.mrf.mxu0
      %v871 = vadd.f32 %v375, %v870
      %v872 = vpop.f32.mrf.mxu0
      %873 = vmatprep.mubr.bf16.mxu0 0
      %874 = vmatmul.mubr.bf16.gmra.mxu0 %v637
      %v875 = vpop.f32.mrf.mxu0
      %v876 = vadd.f32 %v375, %v875
      %v877 = vpop.f32.mrf.mxu0
      %v878 = vpop.f32.mrf.mxu0
      %v879 = vadd.f32 %v375, %v878
      %v880 = vpop.f32.mrf.mxu0
      %881 = vmatprep.mubr.bf16.mxu0 0
      %882 = vmatmul.mubr.bf16.gmra.mxu0 %v638
      %v883 = vpop.f32.mrf.mxu0
      %v884 = vadd.f32 %v375, %v883
      %v885 = vpop.f32.mrf.mxu0
      %v886 = vpop.f32.mrf.mxu0
      %v887 = vadd.f32 %v375, %v886
      %v888 = vpop.f32.mrf.mxu0
      %889 = vmatprep.mubr.bf16.mxu0 0
      %890 = vmatmul.mubr.bf16.gmra.mxu0 %v639
      %v891 = vpop.f32.mrf.mxu0
      %v892 = vadd.f32 %v375, %v891
      %v893 = vpop.f32.mrf.mxu0
      %v894 = vpop.f32.mrf.mxu0
      %v895 = vadd.f32 %v375, %v894
      %v896 = vpop.f32.mrf.mxu0
      %897 = vmatprep.mubr.bf16.mxu0 0
      %898 = vmatmul.mubr.bf16.gmra.mxu0 %v640
      %v899 = vpop.f32.mrf.mxu0
      %v900 = vadd.f32 %v375, %v899
      %v901 = vpop.f32.mrf.mxu0
      %v902 = vpop.f32.mrf.mxu0
      %v903 = vadd.f32 %v375, %v902
      %v904 = vpop.f32.mrf.mxu0
      %905 = vmatprep.mubr.bf16.mxu0 0
      %906 = vmatmul.mubr.bf16.gmra.mxu0 %v641
      %v907 = vpop.f32.mrf.mxu0
      %v908 = vadd.f32 %v375, %v907
      %v909 = vpop.f32.mrf.mxu0
      %v910 = vpop.f32.mrf.mxu0
      %v911 = vadd.f32 %v375, %v910
      %v912 = vpop.f32.mrf.mxu0
      %913 = vmatprep.mubr.bf16.mxu0 0
      %914 = vmatmul.mubr.bf16.gmra.mxu0 %v642
      %v915 = vpop.f32.mrf.mxu0
      %v916 = vadd.f32 %v375, %v915
      %v917 = vpop.f32.mrf.mxu0
      %v918 = vpop.f32.mrf.mxu0
      %v919 = vadd.f32 %v375, %v918
      %v920 = vpop.f32.mrf.mxu0
      %921 = vmatprep.mubr.bf16.mxu0 0
      %922 = vmatmul.mubr.bf16.gmra.mxu0 %v643
      %v923 = vpop.f32.mrf.mxu0
      %v924 = vadd.f32 %v375, %v923
      %v925 = vpop.f32.mrf.mxu0
      %v926 = vpop.f32.mrf.mxu0
      %v927 = vadd.f32 %v375, %v926
      %v928 = vpop.f32.mrf.mxu0
      %929 = vmatprep.mubr.bf16.mxu0 0
      %930 = vmatmul.mubr.bf16.gmra.mxu0 %v644
      %v931 = vpop.f32.mrf.mxu0
      %v932 = vadd.f32 %v375, %v931
      %v933 = vpop.f32.mrf.mxu0
      %v934 = vpop.f32.mrf.mxu0
      %v935 = vadd.f32 %v375, %v934
      %v936 = vpop.f32.mrf.mxu0
      %937 = vmatprep.mubr.bf16.mxu0 0
      %938 = vmatmul.mubr.bf16.gmra.mxu0 %v645
      %v939 = vpop.f32.mrf.mxu0
      %v940 = vadd.f32 %v375, %v939
      %v941 = vpop.f32.mrf.mxu0
      %v942 = vpop.f32.mrf.mxu0
      %v943 = vadd.f32 %v375, %v942
      %v944 = vpop.f32.mrf.mxu0
      %945 = vmatprep.mubr.bf16.mxu0 0
      %946 = vmatmul.mubr.bf16.gmra.mxu0 %v646
      %v947 = vpop.f32.mrf.mxu0
      %v948 = vadd.f32 %v375, %v947
      %v949 = vpop.f32.mrf.mxu0
      %v950 = vpop.f32.mrf.mxu0
      %v951 = vadd.f32 %v375, %v950
      %v952 = vpop.f32.mrf.mxu0
      %953 = vmatprep.mubr.bf16.mxu0 0
      %954 = vmatmul.mubr.bf16.gmra.mxu0 %v647
      %v955 = vpop.f32.mrf.mxu0
      %v956 = vadd.f32 %v375, %v955
      %v957 = vpop.f32.mrf.mxu0
      %v958 = vpop.f32.mrf.mxu0
      %v959 = vadd.f32 %v375, %v958
      %v960 = vpop.f32.mrf.mxu0
      %961 = vmatprep.mubr.bf16.mxu0 0
      %962 = vmatmul.mubr.bf16.gmra.mxu0 %v648
      %v963 = vpop.f32.mrf.mxu0
      %v964 = vadd.f32 %v375, %v963
      %v965 = vpop.f32.mrf.mxu0
      %v966 = vpop.f32.mrf.mxu0
      %v967 = vadd.f32 %v375, %v966
      %v968 = vpop.f32.mrf.mxu0
      %969 = vmatprep.mubr.bf16.mxu0 0
      %970 = vmatmul.mubr.bf16.gmra.mxu0 %v649
      %v971 = vpop.f32.mrf.mxu0
      %v972 = vadd.f32 %v375, %v971
      %v973 = vpop.f32.mrf.mxu0
      %v974 = vpop.f32.mrf.mxu0
      %v975 = vadd.f32 %v375, %v974
      %v976 = vpop.f32.mrf.mxu0
      %977 = vmatprep.mubr.bf16.mxu0 0
      %978 = vmatmul.mubr.bf16.gmra.mxu0 %v650
      %v979 = vpop.f32.mrf.mxu0
      %v980 = vadd.f32 %v375, %v979
      %v981 = vpop.f32.mrf.mxu0
      %v982 = vpop.f32.mrf.mxu0
      %v983 = vadd.f32 %v375, %v982
      %v984 = vpop.f32.mrf.mxu0
      %985 = vmatprep.mubr.bf16.mxu0 0
      %986 = vmatmul.mubr.bf16.gmra.mxu0 %v651
      %v987 = vpop.f32.mrf.mxu0
      %v988 = vadd.f32 %v375, %v987
      %v989 = vpop.f32.mrf.mxu0
      %v990 = vpop.f32.mrf.mxu0
      %v991 = vadd.f32 %v375, %v990
      %v992 = vpop.f32.mrf.mxu0
      %993 = vmatprep.mubr.bf16.mxu0 0
      %994 = vmatmul.mubr.bf16.gmra.mxu0 %v652
      %v995 = vpop.f32.mrf.mxu0
      %v996 = vadd.f32 %v375, %v995
      %v997 = vpop.f32.mrf.mxu0
      %v998 = vpop.f32.mrf.mxu0
      %v999 = vadd.f32 %v375, %v998
      %v1000 = vpop.f32.mrf.mxu0
      %1001 = vmatprep.mubr.bf16.mxu0 0
      %1002 = vmatmul.mubr.bf16.gmra.mxu0 %v653
      %v1003 = vpop.f32.mrf.mxu0
      %v1004 = vadd.f32 %v375, %v1003
      %v1005 = vpop.f32.mrf.mxu0
      %v1006 = vpop.f32.mrf.mxu0
      %v1007 = vadd.f32 %v375, %v1006
      %v1008 = vpop.f32.mrf.mxu0
      %1009 = vmatprep.mubr.bf16.mxu0 0
      %1010 = vmatmul.mubr.bf16.gmra.mxu0 %v654
      %v1011 = vpop.f32.mrf.mxu0
      %v1012 = vadd.f32 %v375, %v1011
      %v1013 = vpop.f32.mrf.mxu0
      %v1014 = vpop.f32.mrf.mxu0
      %v1015 = vadd.f32 %v375, %v1014
      %v1016 = vpop.f32.mrf.mxu0
      %1017 = vmatprep.mubr.bf16.mxu0 0
      %1018 = vmatmul.mubr.bf16.gmra.mxu0 %v655
      %v1019 = vpop.f32.mrf.mxu0
      %v1020 = vadd.f32 %v375, %v1019
      %v1021 = vpop.f32.mrf.mxu0
      %v1022 = vpop.f32.mrf.mxu0
      %v1023 = vadd.f32 %v375, %v1022
      %v1024 = vpop.f32.mrf.mxu0
      %1025 = vmatprep.mubr.bf16.mxu0 0
      %1026 = vmatmul.mubr.bf16.gmra.mxu0 %v656
      %v1027 = vpop.f32.mrf.mxu0
      %v1028 = vadd.f32 %v375, %v1027
      %v1029 = vpop.f32.mrf.mxu0
      %v1030 = vpop.f32.mrf.mxu0
      %v1031 = vadd.f32 %v375, %v1030
      %v1032 = vpop.f32.mrf.mxu0
      %1033 = vmatprep.mubr.bf16.mxu0 0
      %1034 = vmatmul.mubr.bf16.gmra.mxu0 %v657
      %v1035 = vpop.f32.mrf.mxu0
      %v1036 = vadd.f32 %v375, %v1035
      %v1037 = vpop.f32.mrf.mxu0
      %v1038 = vpop.f32.mrf.mxu0
      %v1039 = vadd.f32 %v375, %v1038
      %v1040 = vpop.f32.mrf.mxu0
      %1041 = vmatprep.mubr.bf16.mxu0 0
      %1042 = vmatmul.mubr.bf16.gmra.mxu0 %v658
      %v1043 = vpop.f32.mrf.mxu0
      %v1044 = vadd.f32 %v375, %v1043
      %v1045 = vpop.f32.mrf.mxu0
      %v1046 = vpop.f32.mrf.mxu0
      %v1047 = vadd.f32 %v375, %v1046
      %v1048 = vpop.f32.mrf.mxu0
      %1049 = vmatprep.mubr.bf16.mxu0 0
      %1050 = vmatmul.mubr.bf16.gmra.mxu0 %v659
      %v1051 = vpop.f32.mrf.mxu0
      %v1052 = vadd.f32 %v375, %v1051
      %v1053 = vpop.f32.mrf.mxu0
      %v1054 = vpop.f32.mrf.mxu0
      %v1055 = vadd.f32 %v375, %v1054
      %v1056 = vpop.f32.mrf.mxu0
      %1057 = vmatprep.mubr.bf16.mxu0 0
      %1058 = vmatmul.mubr.bf16.gmra.mxu0 %v660
      %v1059 = vpop.f32.mrf.mxu0
      %v1060 = vadd.f32 %v375, %v1059
      %v1061 = vpop.f32.mrf.mxu0
      %v1062 = vpop.f32.mrf.mxu0
      %v1063 = vadd.f32 %v375, %v1062
      %v1064 = vpop.f32.mrf.mxu0
      %1065 = vmatprep.mubr.bf16.mxu0 0
      %1066 = vmatmul.mubr.bf16.gmra.mxu0 %v661
      %v1067 = vpop.f32.mrf.mxu0
      %v1068 = vadd.f32 %v375, %v1067
      %v1069 = vpop.f32.mrf.mxu0
      %v1070 = vpop.f32.mrf.mxu0
      %v1071 = vadd.f32 %v375, %v1070
      %v1072 = vpop.f32.mrf.mxu0
      %1073 = vmatprep.mubr.bf16.mxu0 0
      %1074 = vmatmul.mubr.bf16.gmra.mxu0 %v662
      %v1075 = vpop.f32.mrf.mxu0
      %v1076 = vadd.f32 %v375, %v1075
      %v1077 = vpop.f32.mrf.mxu0
      %v1078 = vpop.f32.mrf.mxu0
      %v1079 = vadd.f32 %v375, %v1078
      %v1080 = vpop.f32.mrf.mxu0
      %1081 = vmatprep.mubr.bf16.mxu0 0
      %1082 = vmatmul.mubr.bf16.gmra.mxu0 %v663
      %v1083 = vpop.f32.mrf.mxu0
      %v1084 = vadd.f32 %v375, %v1083
      %v1085 = vpop.f32.mrf.mxu0
      %v1086 = vpop.f32.mrf.mxu0
      %v1087 = vadd.f32 %v375, %v1086
      %v1088 = vpop.f32.mrf.mxu0
      %1089 = vmatprep.mubr.bf16.mxu0 0
      %1090 = vmatmul.mubr.bf16.gmra.mxu0 %v664
      %v1091 = vpop.f32.mrf.mxu0
      %v1092 = vadd.f32 %v375, %v1091
      %v1093 = vpop.f32.mrf.mxu0
      %v1094 = vpop.f32.mrf.mxu0
      %v1095 = vadd.f32 %v375, %v1094
      %v1096 = vpop.f32.mrf.mxu0
      %1097 = vmatprep.mubr.bf16.mxu0 0
      %1098 = vmatmul.mubr.bf16.gmra.mxu0 %v665
      %v1099 = vpop.f32.mrf.mxu0
      %v1100 = vadd.f32 %v375, %v1099
      %v1101 = vpop.f32.mrf.mxu0
      %v1102 = vpop.f32.mrf.mxu0
      %v1103 = vadd.f32 %v375, %v1102
      %v1104 = vpop.f32.mrf.mxu0
      %1105 = vmatprep.mubr.bf16.mxu0 0
      %1106 = vmatmul.mubr.bf16.gmra.mxu0 %v666
      %v1107 = vpop.f32.mrf.mxu0
      %v1108 = vadd.f32 %v375, %v1107
      %v1109 = vpop.f32.mrf.mxu0
      %v1110 = vpop.f32.mrf.mxu0
      %v1111 = vadd.f32 %v375, %v1110
      %v1112 = vpop.f32.mrf.mxu0
      %1113 = vmatprep.mubr.bf16.mxu0 0
      %1114 = vmatmul.mubr.bf16.gmra.mxu0 %v667
      %v1115 = vpop.f32.mrf.mxu0
      %v1116 = vadd.f32 %v375, %v1115
      %v1117 = vpop.f32.mrf.mxu0
      %v1118 = vpop.f32.mrf.mxu0
      %v1119 = vadd.f32 %v375, %v1118
      %v1120 = vpop.f32.mrf.mxu0
      %1121 = vmatprep.mubr.bf16.mxu0 0
      %1122 = vmatmul.mubr.bf16.gmra.mxu0 %v668
      %v1123 = vpop.f32.mrf.mxu0
      %v1124 = vadd.f32 %v375, %v1123
      %v1125 = vpop.f32.mrf.mxu0
      %v1126 = vpop.f32.mrf.mxu0
      %v1127 = vadd.f32 %v375, %v1126
      %v1128 = vpop.f32.mrf.mxu0
      %1129 = vmatprep.mubr.bf16.mxu0 0
      %1130 = vmatmul.mubr.bf16.gmra.mxu0 %v669
      %v1131 = vpop.f32.mrf.mxu0
      %v1132 = vadd.f32 %v375, %v1131
      %v1133 = vpop.f32.mrf.mxu0
      %v1134 = vpop.f32.mrf.mxu0
      %v1135 = vadd.f32 %v375, %v1134
      %v1136 = vpop.f32.mrf.mxu0
      %1137 = vmatprep.mubr.bf16.mxu0 0
      %1138 = vmatmul.mubr.bf16.gmra.mxu0 %v670
      %v1139 = vpop.f32.mrf.mxu0
      %v1140 = vadd.f32 %v375, %v1139
      %v1141 = vpop.f32.mrf.mxu0
      %v1142 = vpop.f32.mrf.mxu0
      %v1143 = vadd.f32 %v375, %v1142
      %v1144 = vpop.f32.mrf.mxu0
      %1145 = vmatprep.mubr.bf16.mxu0 0
      %1146 = vmatmul.mubr.bf16.gmra.mxu0 %v671
      %v1147 = vpop.f32.mrf.mxu0
      %v1148 = vadd.f32 %v375, %v1147
      %v1149 = vpop.f32.mrf.mxu0
      %v1150 = vpop.f32.mrf.mxu0
      %v1151 = vadd.f32 %v375, %v1150
      %v1152 = vpop.f32.mrf.mxu0
      %1153 = vmatprep.mubr.bf16.mxu0 0
      %1154 = vmatmul.mubr.bf16.gmra.mxu0 %v672
      %v1155 = vpop.f32.mrf.mxu0
      %v1156 = vadd.f32 %v375, %v1155
      %v1157 = vpop.f32.mrf.mxu0
      %v1158 = vpop.f32.mrf.mxu0
      %v1159 = vadd.f32 %v375, %v1158
      %v1160 = vpop.f32.mrf.mxu0
      %1161 = vmatprep.mubr.bf16.mxu0 0
      %1162 = vmatmul.mubr.bf16.gmra.mxu0 %v673
      %v1163 = vpop.f32.mrf.mxu0
      %v1164 = vadd.f32 %v375, %v1163
      %v1165 = vpop.f32.mrf.mxu0
      %v1166 = vpop.f32.mrf.mxu0
      %v1167 = vadd.f32 %v375, %v1166
      %v1168 = vpop.f32.mrf.mxu0
      %1169 = vmatprep.mubr.bf16.mxu0 0
      %1170 = vmatmul.mubr.bf16.gmra.mxu0 %v674
      %v1171 = vpop.f32.mrf.mxu0
      %v1172 = vadd.f32 %v375, %v1171
      %v1173 = vpop.f32.mrf.mxu0
      %v1174 = vpop.f32.mrf.mxu0
      %v1175 = vadd.f32 %v375, %v1174
      %v1176 = vpop.f32.mrf.mxu0
      %1177 = vmatprep.mubr.bf16.mxu0 0
      %1178 = vmatmul.mubr.bf16.gmra.mxu0 %v675
      %v1179 = vpop.f32.mrf.mxu0
      %v1180 = vadd.f32 %v375, %v1179
      %v1181 = vpop.f32.mrf.mxu0
      %v1182 = vpop.f32.mrf.mxu0
      %v1183 = vadd.f32 %v375, %v1182
      %v1184 = vpop.f32.mrf.mxu0
      %1185 = vmatprep.mubr.bf16.mxu0 0
      %1186 = vmatmul.mubr.bf16.gmra.mxu0 %v676
      %v1187 = vpop.f32.mrf.mxu0
      %v1188 = vadd.f32 %v375, %v1187
      %v1189 = vpop.f32.mrf.mxu0
      %v1190 = vpop.f32.mrf.mxu0
      %v1191 = vadd.f32 %v375, %v1190
      %v1192 = vpop.f32.mrf.mxu0
      %1193 = vmatprep.mubr.bf16.mxu0 0
      %1194 = vmatmul.mubr.bf16.gmra.mxu0 %v677
      %v1195 = vpop.f32.mrf.mxu0
      %v1196 = vadd.f32 %v375, %v1195
      %v1197 = vpop.f32.mrf.mxu0
      %v1198 = vpop.f32.mrf.mxu0
      %v1199 = vadd.f32 %v375, %v1198
      %v1200 = vpop.f32.mrf.mxu0
      %1201 = vmatprep.mubr.bf16.mxu0 0
      %1202 = vmatmul.mubr.bf16.gmra.mxu0 %v678
      %v1203 = vpop.f32.mrf.mxu0
      %v1204 = vadd.f32 %v375, %v1203
      %v1205 = vpop.f32.mrf.mxu0
      %v1206 = vpop.f32.mrf.mxu0
      %v1207 = vadd.f32 %v375, %v1206
      %v1208 = vpop.f32.mrf.mxu0
      %1209 = vmatprep.mubr.bf16.mxu0 0
      %1210 = vmatmul.mubr.bf16.gmra.mxu0 %v679
      %v1211 = vpop.f32.mrf.mxu0
      %v1212 = vadd.f32 %v375, %v1211
      %v1213 = vpop.f32.mrf.mxu0
      %v1214 = vpop.f32.mrf.mxu0
      %v1215 = vadd.f32 %v375, %v1214
      %v1216 = vpop.f32.mrf.mxu0
      %1217 = vmatprep.mubr.bf16.mxu0 0
      %1218 = vmatmul.mubr.bf16.gmra.mxu0 %v680
      %v1219 = vpop.f32.mrf.mxu0
      %v1220 = vadd.f32 %v375, %v1219
      %v1221 = vpop.f32.mrf.mxu0
      %v1222 = vpop.f32.mrf.mxu0
      %v1223 = vadd.f32 %v375, %v1222
      %v1224 = vpop.f32.mrf.mxu0
      %1225 = vmatprep.mubr.bf16.mxu0 0
      %1226 = vmatmul.mubr.bf16.gmra.mxu0 %v681
      %v1227 = vpop.f32.mrf.mxu0
      %v1228 = vadd.f32 %v375, %v1227
      %v1229 = vpop.f32.mrf.mxu0
      %v1230 = vpop.f32.mrf.mxu0
      %v1231 = vadd.f32 %v375, %v1230
      %v1232 = vpop.f32.mrf.mxu0
      %1233 = vmatprep.mubr.bf16.mxu0 0
      %1234 = vmatmul.mubr.bf16.gmra.mxu0 %v682
      %v1235 = vpop.f32.mrf.mxu0
      %v1236 = vadd.f32 %v375, %v1235
      %v1237 = vpop.f32.mrf.mxu0
      %v1238 = vpop.f32.mrf.mxu0
      %v1239 = vadd.f32 %v375, %v1238
      %v1240 = vpop.f32.mrf.mxu0
      %1241 = vmatprep.mubr.bf16.mxu0 0
      %1242 = vmatmul.mubr.bf16.gmra.mxu0 %v683
      %v1243 = vpop.f32.mrf.mxu0
      %v1244 = vadd.f32 %v375, %v1243
      %v1245 = vpop.f32.mrf.mxu0
      %v1246 = vpop.f32.mrf.mxu0
      %v1247 = vadd.f32 %v375, %v1246
      %v1248 = vpop.f32.mrf.mxu0
      %1249 = vmatprep.mubr.bf16.mxu0 0
      %1250 = vmatmul.mubr.bf16.gmra.mxu0 %v684
      %v1251 = vpop.f32.mrf.mxu0
      %v1252 = vadd.f32 %v375, %v1251
      %v1253 = vpop.f32.mrf.mxu0
      %v1254 = vpop.f32.mrf.mxu0
      %v1255 = vadd.f32 %v375, %v1254
      %v1256 = vpop.f32.mrf.mxu0
      %1257 = vmatprep.mubr.bf16.mxu0 0
      %1258 = vmatmul.mubr.bf16.gmra.mxu0 %v685
      %v1259 = vpop.f32.mrf.mxu0
      %v1260 = vadd.f32 %v375, %v1259
      %v1261 = vpop.f32.mrf.mxu0
      %v1262 = vpop.f32.mrf.mxu0
      %v1263 = vadd.f32 %v375, %v1262
      %v1264 = vpop.f32.mrf.mxu0
      %1265 = vmatprep.mubr.bf16.mxu0 0
      %1266 = vmatmul.mubr.bf16.gmra.mxu0 %v686
      %v1267 = vpop.f32.mrf.mxu0
      %v1268 = vadd.f32 %v375, %v1267
      %v1269 = vpop.f32.mrf.mxu0
      %v1270 = vpop.f32.mrf.mxu0
      %v1271 = vadd.f32 %v375, %v1270
      %v1272 = vpop.f32.mrf.mxu0
      %1273 = vmatprep.mubr.bf16.mxu0 0
      %1274 = vmatmul.mubr.bf16.gmra.mxu0 %v687
      %v1275 = vpop.f32.mrf.mxu0
      %v1276 = vadd.f32 %v375, %v1275
      %v1277 = vpop.f32.mrf.mxu0
      %v1278 = vpop.f32.mrf.mxu0
      %v1279 = vadd.f32 %v375, %v1278
      %v1280 = vpop.f32.mrf.mxu0
      %1281 = vmatprep.mubr.bf16.mxu0 0
      %1282 = vmatmul.mubr.bf16.gmra.mxu0 %v688
      %v1283 = vpop.f32.mrf.mxu0
      %v1284 = vadd.f32 %v375, %v1283
      %v1285 = vpop.f32.mrf.mxu0
      %v1286 = vpop.f32.mrf.mxu0
      %v1287 = vadd.f32 %v375, %v1286
      %v1288 = vpop.f32.mrf.mxu0
      %1289 = vmatprep.mubr.bf16.mxu0 0
      %1290 = vmatmul.mubr.bf16.gmra.mxu0 %v689
      %v1291 = vpop.f32.mrf.mxu0
      %v1292 = vadd.f32 %v375, %v1291
      %v1293 = vpop.f32.mrf.mxu0
      %v1294 = vpop.f32.mrf.mxu0
      %v1295 = vadd.f32 %v375, %v1294
      %v1296 = vpop.f32.mrf.mxu0
      %1297 = vmatprep.mubr.bf16.mxu0 0
      %1298 = vmatmul.mubr.bf16.gmra.mxu0 %v690
      %v1299 = vpop.f32.mrf.mxu0
      %v1300 = vadd.f32 %v375, %v1299
      %v1301 = vpop.f32.mrf.mxu0
      %v1302 = vpop.f32.mrf.mxu0
      %v1303 = vadd.f32 %v375, %v1302
      %v1304 = vpop.f32.mrf.mxu0
      %1305 = vmatprep.mubr.bf16.mxu0 0
      %1306 = vmatmul.mubr.bf16.gmra.mxu0 %v691
      %v1307 = vpop.f32.mrf.mxu0
      %v1308 = vadd.f32 %v375, %v1307
      %v1309 = vpop.f32.mrf.mxu0
      %v1310 = vpop.f32.mrf.mxu0
      %v1311 = vadd.f32 %v375, %v1310
      %v1312 = vpop.f32.mrf.mxu0
      %1313 = vmatprep.mubr.bf16.mxu0 0
      %1314 = vmatmul.mubr.bf16.gmra.mxu0 %v692
      %v1315 = vpop.f32.mrf.mxu0
      %v1316 = vadd.f32 %v375, %v1315
      %v1317 = vpop.f32.mrf.mxu0
      %v1318 = vpop.f32.mrf.mxu0
      %v1319 = vadd.f32 %v375, %v1318
      %v1320 = vpop.f32.mrf.mxu0
      %1321 = vmatprep.mubr.bf16.mxu0 0
      %1322 = vmatmul.mubr.bf16.gmra.mxu0 %v693
      %v1323 = vpop.f32.mrf.mxu0
      %v1324 = vadd.f32 %v375, %v1323
      %v1325 = vpop.f32.mrf.mxu0
      %v1326 = vpop.f32.mrf.mxu0
      %v1327 = vadd.f32 %v375, %v1326
      %v1328 = vpop.f32.mrf.mxu0
      %1329 = vmatprep.mubr.bf16.mxu0 0
      %1330 = vmatmul.mubr.bf16.gmra.mxu0 %v694
      %v1331 = vpop.f32.mrf.mxu0
      %v1332 = vadd.f32 %v375, %v1331
      %v1333 = vpop.f32.mrf.mxu0
      %v1334 = vpop.f32.mrf.mxu0
      %v1335 = vadd.f32 %v375, %v1334
      %v1336 = vpop.f32.mrf.mxu0
      %1337 = vmatprep.mubr.bf16.mxu0 0
      %1338 = vmatmul.mubr.bf16.gmra.mxu0 %v695
      %v1339 = vpop.f32.mrf.mxu0
      %v1340 = vadd.f32 %v375, %v1339
      %v1341 = vpop.f32.mrf.mxu0
      %v1342 = vpop.f32.mrf.mxu0
      %v1343 = vadd.f32 %v375, %v1342
      %v1344 = vpop.f32.mrf.mxu0
      %1345 = vmatprep.mubr.bf16.mxu0 0
      %1346 = vmatmul.mubr.bf16.gmra.mxu0 %v696
      %v1347 = vpop.f32.mrf.mxu0
      %v1348 = vadd.f32 %v375, %v1347
      %v1349 = vpop.f32.mrf.mxu0
      %v1350 = vpop.f32.mrf.mxu0
      %v1351 = vadd.f32 %v375, %v1350
      %v1352 = vpop.f32.mrf.mxu0
      %1353 = vdwg.mxu0
      %vm1354 = vcmp.ge.f32.partialorder %v844, 0.0
      %vm1355 = vcmp.ge.f32.partialorder %v847, 0.0
      %vm1356 = vcmp.ge.f32.partialorder %v852, 0.0
      %vm1357 = vcmp.ge.f32.partialorder %v855, 0.0
      %vm1358 = vcmp.ge.f32.partialorder %v860, 0.0
      %vm1359 = vcmp.ge.f32.partialorder %v863, 0.0
      %vm1360 = vcmp.ge.f32.partialorder %v868, 0.0
      %vm1361 = vcmp.ge.f32.partialorder %v871, 0.0
      %vm1362 = vcmp.ge.f32.partialorder %v876, 0.0
      %vm1363 = vcmp.ge.f32.partialorder %v879, 0.0
      %vm1364 = vcmp.ge.f32.partialorder %v884, 0.0
      %vm1365 = vcmp.ge.f32.partialorder %v887, 0.0
      %vm1366 = vcmp.ge.f32.partialorder %v892, 0.0
      %vm1367 = vcmp.ge.f32.partialorder %v895, 0.0
      %vm1368 = vcmp.ge.f32.partialorder %v900, 0.0
      %vm1369 = vcmp.ge.f32.partialorder %v903, 0.0
      %vm1370 = vcmp.ge.f32.partialorder %v908, 0.0
      %vm1371 = vcmp.ge.f32.partialorder %v911, 0.0
      %vm1372 = vcmp.ge.f32.partialorder %v916, 0.0
      %vm1373 = vcmp.ge.f32.partialorder %v919, 0.0
      %vm1374 = vcmp.ge.f32.partialorder %v924, 0.0
      %vm1375 = vcmp.ge.f32.partialorder %v927, 0.0
      %vm1376 = vcmp.ge.f32.partialorder %v932, 0.0
      %vm1377 = vcmp.ge.f32.partialorder %v935, 0.0
      %vm1378 = vcmp.ge.f32.partialorder %v940, 0.0
      %vm1379 = vcmp.ge.f32.partialorder %v943, 0.0
      %vm1380 = vcmp.ge.f32.partialorder %v948, 0.0
      %vm1381 = vcmp.ge.f32.partialorder %v951, 0.0
      %vm1382 = vcmp.ge.f32.partialorder %v956, 0.0
      %vm1383 = vcmp.ge.f32.partialorder %v959, 0.0
      %vm1384 = vcmp.ge.f32.partialorder %v964, 0.0
      %vm1385 = vcmp.ge.f32.partialorder %v967, 0.0
      %vm1386 = vcmp.ge.f32.partialorder %v972, 0.0
      %vm1387 = vcmp.ge.f32.partialorder %v975, 0.0
      %vm1388 = vcmp.ge.f32.partialorder %v980, 0.0
      %vm1389 = vcmp.ge.f32.partialorder %v983, 0.0
      %vm1390 = vcmp.ge.f32.partialorder %v988, 0.0
      %vm1391 = vcmp.ge.f32.partialorder %v991, 0.0
      %vm1392 = vcmp.ge.f32.partialorder %v996, 0.0
      %vm1393 = vcmp.ge.f32.partialorder %v999, 0.0
      %vm1394 = vcmp.ge.f32.partialorder %v1004, 0.0
      %vm1395 = vcmp.ge.f32.partialorder %v1007, 0.0
      %vm1396 = vcmp.ge.f32.partialorder %v1012, 0.0
      %vm1397 = vcmp.ge.f32.partialorder %v1015, 0.0
      %vm1398 = vcmp.ge.f32.partialorder %v1020, 0.0
      %vm1399 = vcmp.ge.f32.partialorder %v1023, 0.0
      %vm1400 = vcmp.ge.f32.partialorder %v1028, 0.0
      %vm1401 = vcmp.ge.f32.partialorder %v1031, 0.0
      %vm1402 = vcmp.ge.f32.partialorder %v1036, 0.0
      %vm1403 = vcmp.ge.f32.partialorder %v1039, 0.0
      %vm1404 = vcmp.ge.f32.partialorder %v1044, 0.0
      %vm1405 = vcmp.ge.f32.partialorder %v1047, 0.0
      %vm1406 = vcmp.ge.f32.partialorder %v1052, 0.0
      %vm1407 = vcmp.ge.f32.partialorder %v1055, 0.0
      %vm1408 = vcmp.ge.f32.partialorder %v1060, 0.0
      %vm1409 = vcmp.ge.f32.partialorder %v1063, 0.0
      %vm1410 = vcmp.ge.f32.partialorder %v1068, 0.0
      %vm1411 = vcmp.ge.f32.partialorder %v1071, 0.0
      %vm1412 = vcmp.ge.f32.partialorder %v1076, 0.0
      %vm1413 = vcmp.ge.f32.partialorder %v1079, 0.0
      %vm1414 = vcmp.ge.f32.partialorder %v1084, 0.0
      %vm1415 = vcmp.ge.f32.partialorder %v1087, 0.0
      %vm1416 = vcmp.ge.f32.partialorder %v1092, 0.0
      %vm1417 = vcmp.ge.f32.partialorder %v1095, 0.0
      %vm1418 = vcmp.ge.f32.partialorder %v1100, 0.0
      %vm1419 = vcmp.ge.f32.partialorder %v1103, 0.0
      %vm1420 = vcmp.ge.f32.partialorder %v1108, 0.0
      %vm1421 = vcmp.ge.f32.partialorder %v1111, 0.0
      %vm1422 = vcmp.ge.f32.partialorder %v1116, 0.0
      %vm1423 = vcmp.ge.f32.partialorder %v1119, 0.0
      %vm1424 = vcmp.ge.f32.partialorder %v1124, 0.0
      %vm1425 = vcmp.ge.f32.partialorder %v1127, 0.0
      %vm1426 = vcmp.ge.f32.partialorder %v1132, 0.0
      %vm1427 = vcmp.ge.f32.partialorder %v1135, 0.0
      %vm1428 = vcmp.ge.f32.partialorder %v1140, 0.0
      %vm1429 = vcmp.ge.f32.partialorder %v1143, 0.0
      %vm1430 = vcmp.ge.f32.partialorder %v1148, 0.0
      %vm1431 = vcmp.ge.f32.partialorder %v1151, 0.0
      %vm1432 = vcmp.ge.f32.partialorder %v1156, 0.0
      %vm1433 = vcmp.ge.f32.partialorder %v1159, 0.0
      %vm1434 = vcmp.ge.f32.partialorder %v1164, 0.0
      %vm1435 = vcmp.ge.f32.partialorder %v1167, 0.0
      %vm1436 = vcmp.ge.f32.partialorder %v1172, 0.0
      %vm1437 = vcmp.ge.f32.partialorder %v1175, 0.0
      %vm1438 = vcmp.ge.f32.partialorder %v1180, 0.0
      %vm1439 = vcmp.ge.f32.partialorder %v1183, 0.0
      %vm1440 = vcmp.ge.f32.partialorder %v1188, 0.0
      %vm1441 = vcmp.ge.f32.partialorder %v1191, 0.0
      %vm1442 = vcmp.ge.f32.partialorder %v1196, 0.0
      %vm1443 = vcmp.ge.f32.partialorder %v1199, 0.0
      %vm1444 = vcmp.ge.f32.partialorder %v1204, 0.0
      %vm1445 = vcmp.ge.f32.partialorder %v1207, 0.0
      %vm1446 = vcmp.ge.f32.partialorder %v1212, 0.0
      %vm1447 = vcmp.ge.f32.partialorder %v1215, 0.0
      %vm1448 = vcmp.ge.f32.partialorder %v1220, 0.0
      %vm1449 = vcmp.ge.f32.partialorder %v1223, 0.0
      %vm1450 = vcmp.ge.f32.partialorder %v1228, 0.0
      %vm1451 = vcmp.ge.f32.partialorder %v1231, 0.0
      %vm1452 = vcmp.ge.f32.partialorder %v1236, 0.0
      %vm1453 = vcmp.ge.f32.partialorder %v1239, 0.0
      %vm1454 = vcmp.ge.f32.partialorder %v1244, 0.0
      %vm1455 = vcmp.ge.f32.partialorder %v1247, 0.0
      %vm1456 = vcmp.ge.f32.partialorder %v1252, 0.0
      %vm1457 = vcmp.ge.f32.partialorder %v1255, 0.0
      %vm1458 = vcmp.ge.f32.partialorder %v1260, 0.0
      %vm1459 = vcmp.ge.f32.partialorder %v1263, 0.0
      %vm1460 = vcmp.ge.f32.partialorder %v1268, 0.0
      %vm1461 = vcmp.ge.f32.partialorder %v1271, 0.0
      %vm1462 = vcmp.ge.f32.partialorder %v1276, 0.0
      %vm1463 = vcmp.ge.f32.partialorder %v1279, 0.0
      %vm1464 = vcmp.ge.f32.partialorder %v1284, 0.0
      %vm1465 = vcmp.ge.f32.partialorder %v1287, 0.0
      %vm1466 = vcmp.ge.f32.partialorder %v1292, 0.0
      %vm1467 = vcmp.ge.f32.partialorder %v1295, 0.0
      %vm1468 = vcmp.ge.f32.partialorder %v1300, 0.0
      %vm1469 = vcmp.ge.f32.partialorder %v1303, 0.0
      %vm1470 = vcmp.ge.f32.partialorder %v1308, 0.0
      %vm1471 = vcmp.ge.f32.partialorder %v1311, 0.0
      %vm1472 = vcmp.ge.f32.partialorder %v1316, 0.0
      %vm1473 = vcmp.ge.f32.partialorder %v1319, 0.0
      %vm1474 = vcmp.ge.f32.partialorder %v1324, 0.0
      %vm1475 = vcmp.ge.f32.partialorder %v1327, 0.0
      %vm1476 = vcmp.ge.f32.partialorder %v1332, 0.0
      %vm1477 = vcmp.ge.f32.partialorder %v1335, 0.0
      %vm1478 = vcmp.ge.f32.partialorder %v1340, 0.0
      %vm1479 = vcmp.ge.f32.partialorder %v1343, 0.0
      %vm1480 = vcmp.ge.f32.partialorder %v1348, 0.0
      %vm1481 = vcmp.ge.f32.partialorder %v1351, 0.0
      %v1482 = vmul.f32 %v844, 0.2
      %v1483 = vmul.f32 %v847, 0.2
      %v1484 = vmul.f32 %v852, 0.2
      %v1485 = vmul.f32 %v855, 0.2
      %v1486 = vmul.f32 %v860, 0.2
      %v1487 = vmul.f32 %v863, 0.2
      %v1488 = vmul.f32 %v868, 0.2
      %v1489 = vmul.f32 %v871, 0.2
      %v1490 = vmul.f32 %v876, 0.2
      %v1491 = vmul.f32 %v879, 0.2
      %v1492 = vmul.f32 %v884, 0.2
      %v1493 = vmul.f32 %v887, 0.2
      %v1494 = vmul.f32 %v892, 0.2
      %v1495 = vmul.f32 %v895, 0.2
      %v1496 = vmul.f32 %v900, 0.2
      %v1497 = vmul.f32 %v903, 0.2
      %v1498 = vmul.f32 %v908, 0.2
      %v1499 = vmul.f32 %v911, 0.2
      %v1500 = vmul.f32 %v916, 0.2
      %v1501 = vmul.f32 %v919, 0.2
      %v1502 = vmul.f32 %v924, 0.2
      %v1503 = vmul.f32 %v927, 0.2
      %v1504 = vmul.f32 %v932, 0.2
      %v1505 = vmul.f32 %v935, 0.2
      %v1506 = vmul.f32 %v940, 0.2
      %v1507 = vmul.f32 %v943, 0.2
      %v1508 = vmul.f32 %v948, 0.2
      %v1509 = vmul.f32 %v951, 0.2
      %v1510 = vmul.f32 %v956, 0.2
      %v1511 = vmul.f32 %v959, 0.2
      %v1512 = vmul.f32 %v964, 0.2
      %v1513 = vmul.f32 %v967, 0.2
      %v1514 = vmul.f32 %v972, 0.2
      %v1515 = vmul.f32 %v975, 0.2
      %v1516 = vmul.f32 %v980, 0.2
      %v1517 = vmul.f32 %v983, 0.2
      %v1518 = vmul.f32 %v988, 0.2
      %v1519 = vmul.f32 %v991, 0.2
      %v1520 = vmul.f32 %v996, 0.2
      %v1521 = vmul.f32 %v999, 0.2
      %v1522 = vmul.f32 %v1004, 0.2
      %v1523 = vmul.f32 %v1007, 0.2
      %v1524 = vmul.f32 %v1012, 0.2
      %v1525 = vmul.f32 %v1015, 0.2
      %v1526 = vmul.f32 %v1020, 0.2
      %v1527 = vmul.f32 %v1023, 0.2
      %v1528 = vmul.f32 %v1028, 0.2
      %v1529 = vmul.f32 %v1031, 0.2
      %v1530 = vmul.f32 %v1036, 0.2
      %v1531 = vmul.f32 %v1039, 0.2
      %v1532 = vmul.f32 %v1044, 0.2
      %v1533 = vmul.f32 %v1047, 0.2
      %v1534 = vmul.f32 %v1052, 0.2
      %v1535 = vmul.f32 %v1055, 0.2
      %v1536 = vmul.f32 %v1060, 0.2
      %v1537 = vmul.f32 %v1063, 0.2
      %v1538 = vmul.f32 %v1068, 0.2
      %v1539 = vmul.f32 %v1071, 0.2
      %v1540 = vmul.f32 %v1076, 0.2
      %v1541 = vmul.f32 %v1079, 0.2
      %v1542 = vmul.f32 %v1084, 0.2
      %v1543 = vmul.f32 %v1087, 0.2
      %v1544 = vmul.f32 %v1092, 0.2
      %v1545 = vmul.f32 %v1095, 0.2
      %v1546 = vmul.f32 %v1100, 0.2
      %v1547 = vmul.f32 %v1103, 0.2
      %v1548 = vmul.f32 %v1108, 0.2
      %v1549 = vmul.f32 %v1111, 0.2
      %v1550 = vmul.f32 %v1116, 0.2
      %v1551 = vmul.f32 %v1119, 0.2
      %v1552 = vmul.f32 %v1124, 0.2
      %v1553 = vmul.f32 %v1127, 0.2
      %v1554 = vmul.f32 %v1132, 0.2
      %v1555 = vmul.f32 %v1135, 0.2
      %v1556 = vmul.f32 %v1140, 0.2
      %v1557 = vmul.f32 %v1143, 0.2
      %v1558 = vmul.f32 %v1148, 0.2
      %v1559 = vmul.f32 %v1151, 0.2
      %v1560 = vmul.f32 %v1156, 0.2
      %v1561 = vmul.f32 %v1159, 0.2
      %v1562 = vmul.f32 %v1164, 0.2
      %v1563 = vmul.f32 %v1167, 0.2
      %v1564 = vmul.f32 %v1172, 0.2
      %v1565 = vmul.f32 %v1175, 0.2
      %v1566 = vmul.f32 %v1180, 0.2
      %v1567 = vmul.f32 %v1183, 0.2
      %v1568 = vmul.f32 %v1188, 0.2
      %v1569 = vmul.f32 %v1191, 0.2
      %v1570 = vmul.f32 %v1196, 0.2
      %v1571 = vmul.f32 %v1199, 0.2
      %v1572 = vmul.f32 %v1204, 0.2
      %v1573 = vmul.f32 %v1207, 0.2
      %v1574 = vmul.f32 %v1212, 0.2
      %v1575 = vmul.f32 %v1215, 0.2
      %v1576 = vmul.f32 %v1220, 0.2
      %v1577 = vmul.f32 %v1223, 0.2
      %v1578 = vmul.f32 %v1228, 0.2
      %v1579 = vmul.f32 %v1231, 0.2
      %v1580 = vmul.f32 %v1236, 0.2
      %v1581 = vmul.f32 %v1239, 0.2
      %v1582 = vmul.f32 %v1244, 0.2
      %v1583 = vmul.f32 %v1247, 0.2
      %v1584 = vmul.f32 %v1252, 0.2
      %v1585 = vmul.f32 %v1255, 0.2
      %v1586 = vmul.f32 %v1260, 0.2
      %v1587 = vmul.f32 %v1263, 0.2
      %v1588 = vmul.f32 %v1268, 0.2
      %v1589 = vmul.f32 %v1271, 0.2
      %v1590 = vmul.f32 %v1276, 0.2
      %v1591 = vmul.f32 %v1279, 0.2
      %v1592 = vmul.f32 %v1284, 0.2
      %v1593 = vmul.f32 %v1287, 0.2
      %v1594 = vmul.f32 %v1292, 0.2
      %v1595 = vmul.f32 %v1295, 0.2
      %v1596 = vmul.f32 %v1300, 0.2
      %v1597 = vmul.f32 %v1303, 0.2
      %v1598 = vmul.f32 %v1308, 0.2
      %v1599 = vmul.f32 %v1311, 0.2
      %v1600 = vmul.f32 %v1316, 0.2
      %v1601 = vmul.f32 %v1319, 0.2
      %v1602 = vmul.f32 %v1324, 0.2
      %v1603 = vmul.f32 %v1327, 0.2
      %v1604 = vmul.f32 %v1332, 0.2
      %v1605 = vmul.f32 %v1335, 0.2
      %v1606 = vmul.f32 %v1340, 0.2
      %v1607 = vmul.f32 %v1343, 0.2
      %v1608 = vmul.f32 %v1348, 0.2
      %v1609 = vmul.f32 %v1351, 0.2
      %v1610 = vsel %vm1354, %v844, %v1482
      %v1611 = vsel %vm1355, %v847, %v1483
      %v1612 = vsel %vm1356, %v852, %v1484
      %v1613 = vsel %vm1357, %v855, %v1485
      %v1614 = vsel %vm1358, %v860, %v1486
      %v1615 = vsel %vm1359, %v863, %v1487
      %v1616 = vsel %vm1360, %v868, %v1488
      %v1617 = vsel %vm1361, %v871, %v1489
      %v1618 = vsel %vm1362, %v876, %v1490
      %v1619 = vsel %vm1363, %v879, %v1491
      %v1620 = vsel %vm1364, %v884, %v1492
      %v1621 = vsel %vm1365, %v887, %v1493
      %v1622 = vsel %vm1366, %v892, %v1494
      %v1623 = vsel %vm1367, %v895, %v1495
      %v1624 = vsel %vm1368, %v900, %v1496
      %v1625 = vsel %vm1369, %v903, %v1497
      %v1626 = vsel %vm1370, %v908, %v1498
      %v1627 = vsel %vm1371, %v911, %v1499
      %v1628 = vsel %vm1372, %v916, %v1500
      %v1629 = vsel %vm1373, %v919, %v1501
      %v1630 = vsel %vm1374, %v924, %v1502
      %v1631 = vsel %vm1375, %v927, %v1503
      %v1632 = vsel %vm1376, %v932, %v1504
      %v1633 = vsel %vm1377, %v935, %v1505
      %v1634 = vsel %vm1378, %v940, %v1506
      %v1635 = vsel %vm1379, %v943, %v1507
      %v1636 = vsel %vm1380, %v948, %v1508
      %v1637 = vsel %vm1381, %v951, %v1509
      %v1638 = vsel %vm1382, %v956, %v1510
      %v1639 = vsel %vm1383, %v959, %v1511
      %v1640 = vsel %vm1384, %v964, %v1512
      %v1641 = vsel %vm1385, %v967, %v1513
      %v1642 = vsel %vm1386, %v972, %v1514
      %v1643 = vsel %vm1387, %v975, %v1515
      %v1644 = vsel %vm1388, %v980, %v1516
      %v1645 = vsel %vm1389, %v983, %v1517
      %v1646 = vsel %vm1390, %v988, %v1518
      %v1647 = vsel %vm1391, %v991, %v1519
      %v1648 = vsel %vm1392, %v996, %v1520
      %v1649 = vsel %vm1393, %v999, %v1521
      %v1650 = vsel %vm1394, %v1004, %v1522
      %v1651 = vsel %vm1395, %v1007, %v1523
      %v1652 = vsel %vm1396, %v1012, %v1524
      %v1653 = vsel %vm1397, %v1015, %v1525
      %v1654 = vsel %vm1398, %v1020, %v1526
      %v1655 = vsel %vm1399, %v1023, %v1527
      %v1656 = vsel %vm1400, %v1028, %v1528
      %v1657 = vsel %vm1401, %v1031, %v1529
      %v1658 = vsel %vm1402, %v1036, %v1530
      %v1659 = vsel %vm1403, %v1039, %v1531
      %v1660 = vsel %vm1404, %v1044, %v1532
      %v1661 = vsel %vm1405, %v1047, %v1533
      %v1662 = vsel %vm1406, %v1052, %v1534
      %v1663 = vsel %vm1407, %v1055, %v1535
      %v1664 = vsel %vm1408, %v1060, %v1536
      %v1665 = vsel %vm1409, %v1063, %v1537
      %v1666 = vsel %vm1410, %v1068, %v1538
      %v1667 = vsel %vm1411, %v1071, %v1539
      %v1668 = vsel %vm1412, %v1076, %v1540
      %v1669 = vsel %vm1413, %v1079, %v1541
      %v1670 = vsel %vm1414, %v1084, %v1542
      %v1671 = vsel %vm1415, %v1087, %v1543
      %v1672 = vsel %vm1416, %v1092, %v1544
      %v1673 = vsel %vm1417, %v1095, %v1545
      %v1674 = vsel %vm1418, %v1100, %v1546
      %v1675 = vsel %vm1419, %v1103, %v1547
      %v1676 = vsel %vm1420, %v1108, %v1548
      %v1677 = vsel %vm1421, %v1111, %v1549
      %v1678 = vsel %vm1422, %v1116, %v1550
      %v1679 = vsel %vm1423, %v1119, %v1551
      %v1680 = vsel %vm1424, %v1124, %v1552
      %v1681 = vsel %vm1425, %v1127, %v1553
      %v1682 = vsel %vm1426, %v1132, %v1554
      %v1683 = vsel %vm1427, %v1135, %v1555
      %v1684 = vsel %vm1428, %v1140, %v1556
      %v1685 = vsel %vm1429, %v1143, %v1557
      %v1686 = vsel %vm1430, %v1148, %v1558
      %v1687 = vsel %vm1431, %v1151, %v1559
      %v1688 = vsel %vm1432, %v1156, %v1560
      %v1689 = vsel %vm1433, %v1159, %v1561
      %v1690 = vsel %vm1434, %v1164, %v1562
      %v1691 = vsel %vm1435, %v1167, %v1563
      %v1692 = vsel %vm1436, %v1172, %v1564
      %v1693 = vsel %vm1437, %v1175, %v1565
      %v1694 = vsel %vm1438, %v1180, %v1566
      %v1695 = vsel %vm1439, %v1183, %v1567
      %v1696 = vsel %vm1440, %v1188, %v1568
      %v1697 = vsel %vm1441, %v1191, %v1569
      %v1698 = vsel %vm1442, %v1196, %v1570
      %v1699 = vsel %vm1443, %v1199, %v1571
      %v1700 = vsel %vm1444, %v1204, %v1572
      %v1701 = vsel %vm1445, %v1207, %v1573
      %v1702 = vsel %vm1446, %v1212, %v1574
      %v1703 = vsel %vm1447, %v1215, %v1575
      %v1704 = vsel %vm1448, %v1220, %v1576
      %v1705 = vsel %vm1449, %v1223, %v1577
      %v1706 = vsel %vm1450, %v1228, %v1578
      %v1707 = vsel %vm1451, %v1231, %v1579
      %v1708 = vsel %vm1452, %v1236, %v1580
      %v1709 = vsel %vm1453, %v1239, %v1581
      %v1710 = vsel %vm1454, %v1244, %v1582
      %v1711 = vsel %vm1455, %v1247, %v1583
      %v1712 = vsel %vm1456, %v1252, %v1584
      %v1713 = vsel %vm1457, %v1255, %v1585
      %v1714 = vsel %vm1458, %v1260, %v1586
      %v1715 = vsel %vm1459, %v1263, %v1587
      %v1716 = vsel %vm1460, %v1268, %v1588
      %v1717 = vsel %vm1461, %v1271, %v1589
      %v1718 = vsel %vm1462, %v1276, %v1590
      %v1719 = vsel %vm1463, %v1279, %v1591
      %v1720 = vsel %vm1464, %v1284, %v1592
      %v1721 = vsel %vm1465, %v1287, %v1593
      %v1722 = vsel %vm1466, %v1292, %v1594
      %v1723 = vsel %vm1467, %v1295, %v1595
      %v1724 = vsel %vm1468, %v1300, %v1596
      %v1725 = vsel %vm1469, %v1303, %v1597
      %v1726 = vsel %vm1470, %v1308, %v1598
      %v1727 = vsel %vm1471, %v1311, %v1599
      %v1728 = vsel %vm1472, %v1316, %v1600
      %v1729 = vsel %vm1473, %v1319, %v1601
      %v1730 = vsel %vm1474, %v1324, %v1602
      %v1731 = vsel %vm1475, %v1327, %v1603
      %v1732 = vsel %vm1476, %v1332, %v1604
      %v1733 = vsel %vm1477, %v1335, %v1605
      %v1734 = vsel %vm1478, %v1340, %v1606
      %v1735 = vsel %vm1479, %v1343, %v1607
      %v1736 = vsel %vm1480, %v1348, %v1608
      %v1737 = vsel %vm1481, %v1351, %v1609
      %v1738 = vpack.c.bf16 %v1611, %v1610
      %v1739 = vpack.c.bf16 %v1613, %v1612
      %v1740 = vpack.c.bf16 %v1615, %v1614
      %v1741 = vpack.c.bf16 %v1617, %v1616
      %v1742 = vpack.c.bf16 %v1619, %v1618
      %v1743 = vpack.c.bf16 %v1621, %v1620
      %v1744 = vpack.c.bf16 %v1623, %v1622
      %v1745 = vpack.c.bf16 %v1625, %v1624
      %v1746 = vpack.c.bf16 %v1627, %v1626
      %v1747 = vpack.c.bf16 %v1629, %v1628
      %v1748 = vpack.c.bf16 %v1631, %v1630
      %v1749 = vpack.c.bf16 %v1633, %v1632
      %v1750 = vpack.c.bf16 %v1635, %v1634
      %v1751 = vpack.c.bf16 %v1637, %v1636
      %v1752 = vpack.c.bf16 %v1639, %v1638
      %v1753 = vpack.c.bf16 %v1641, %v1640
      %v1754 = vpack.c.bf16 %v1643, %v1642
      %v1755 = vpack.c.bf16 %v1645, %v1644
      %v1756 = vpack.c.bf16 %v1647, %v1646
      %v1757 = vpack.c.bf16 %v1649, %v1648
      %v1758 = vpack.c.bf16 %v1651, %v1650
      %v1759 = vpack.c.bf16 %v1653, %v1652
      %v1760 = vpack.c.bf16 %v1655, %v1654
      %v1761 = vpack.c.bf16 %v1657, %v1656
      %v1762 = vpack.c.bf16 %v1659, %v1658
      %v1763 = vpack.c.bf16 %v1661, %v1660
      %v1764 = vpack.c.bf16 %v1663, %v1662
      %v1765 = vpack.c.bf16 %v1665, %v1664
      %v1766 = vpack.c.bf16 %v1667, %v1666
      %v1767 = vpack.c.bf16 %v1669, %v1668
      %v1768 = vpack.c.bf16 %v1671, %v1670
      %v1769 = vpack.c.bf16 %v1673, %v1672
      %v1770 = vpack.c.bf16 %v1675, %v1674
      %v1771 = vpack.c.bf16 %v1677, %v1676
      %v1772 = vpack.c.bf16 %v1679, %v1678
      %v1773 = vpack.c.bf16 %v1681, %v1680
      %v1774 = vpack.c.bf16 %v1683, %v1682
      %v1775 = vpack.c.bf16 %v1685, %v1684
      %v1776 = vpack.c.bf16 %v1687, %v1686
      %v1777 = vpack.c.bf16 %v1689, %v1688
      %v1778 = vpack.c.bf16 %v1691, %v1690
      %v1779 = vpack.c.bf16 %v1693, %v1692
      %v1780 = vpack.c.bf16 %v1695, %v1694
      %v1781 = vpack.c.bf16 %v1697, %v1696
      %v1782 = vpack.c.bf16 %v1699, %v1698
      %v1783 = vpack.c.bf16 %v1701, %v1700
      %v1784 = vpack.c.bf16 %v1703, %v1702
      %v1785 = vpack.c.bf16 %v1705, %v1704
      %v1786 = vpack.c.bf16 %v1707, %v1706
      %v1787 = vpack.c.bf16 %v1709, %v1708
      %v1788 = vpack.c.bf16 %v1711, %v1710
      %v1789 = vpack.c.bf16 %v1713, %v1712
      %v1790 = vpack.c.bf16 %v1715, %v1714
      %v1791 = vpack.c.bf16 %v1717, %v1716
      %v1792 = vpack.c.bf16 %v1719, %v1718
      %v1793 = vpack.c.bf16 %v1721, %v1720
      %v1794 = vpack.c.bf16 %v1723, %v1722
      %v1795 = vpack.c.bf16 %v1725, %v1724
      %v1796 = vpack.c.bf16 %v1727, %v1726
      %v1797 = vpack.c.bf16 %v1729, %v1728
      %v1798 = vpack.c.bf16 %v1731, %v1730
      %v1799 = vpack.c.bf16 %v1733, %v1732
      %v1800 = vpack.c.bf16 %v1735, %v1734
      %v1801 = vpack.c.bf16 %v1737, %v1736
      %v1866 = vunpack.c.l.b16 %v1738
      %v1867 = vunpack.c.h.b16 %v1738
      %v1868 = vunpack.c.l.b16 %v1739
      %v1869 = vunpack.c.h.b16 %v1739
      %v1870 = vunpack.c.l.b16 %v1740
      %v1871 = vunpack.c.h.b16 %v1740
      %v1872 = vunpack.c.l.b16 %v1741
      %v1873 = vunpack.c.h.b16 %v1741
      %v1874 = vunpack.c.l.b16 %v1742
      %v1875 = vunpack.c.h.b16 %v1742
      %v1876 = vunpack.c.l.b16 %v1743
      %v1877 = vunpack.c.h.b16 %v1743
      %v1878 = vunpack.c.l.b16 %v1744
      %v1879 = vunpack.c.h.b16 %v1744
      %v1880 = vunpack.c.l.b16 %v1745
      %v1881 = vunpack.c.h.b16 %v1745
      %v1882 = vunpack.c.l.b16 %v1746
      %v1883 = vunpack.c.h.b16 %v1746
      %v1884 = vunpack.c.l.b16 %v1747
      %v1885 = vunpack.c.h.b16 %v1747
      %v1886 = vunpack.c.l.b16 %v1748
      %v1887 = vunpack.c.h.b16 %v1748
      %v1888 = vunpack.c.l.b16 %v1749
      %v1889 = vunpack.c.h.b16 %v1749
      %v1890 = vunpack.c.l.b16 %v1750
      %v1891 = vunpack.c.h.b16 %v1750
      %v1892 = vunpack.c.l.b16 %v1751
      %v1893 = vunpack.c.h.b16 %v1751
      %v1894 = vunpack.c.l.b16 %v1752
      %v1895 = vunpack.c.h.b16 %v1752
      %v1896 = vunpack.c.l.b16 %v1753
      %v1897 = vunpack.c.h.b16 %v1753
      %v1898 = vunpack.c.l.b16 %v1754
      %v1899 = vunpack.c.h.b16 %v1754
      %v1900 = vunpack.c.l.b16 %v1755
      %v1901 = vunpack.c.h.b16 %v1755
      %v1902 = vunpack.c.l.b16 %v1756
      %v1903 = vunpack.c.h.b16 %v1756
      %v1904 = vunpack.c.l.b16 %v1757
      %v1905 = vunpack.c.h.b16 %v1757
      %v1906 = vunpack.c.l.b16 %v1758
      %v1907 = vunpack.c.h.b16 %v1758
      %v1908 = vunpack.c.l.b16 %v1759
      %v1909 = vunpack.c.h.b16 %v1759
      %v1910 = vunpack.c.l.b16 %v1760
      %v1911 = vunpack.c.h.b16 %v1760
      %v1912 = vunpack.c.l.b16 %v1761
      %v1913 = vunpack.c.h.b16 %v1761
      %v1914 = vunpack.c.l.b16 %v1762
      %v1915 = vunpack.c.h.b16 %v1762
      %v1916 = vunpack.c.l.b16 %v1763
      %v1917 = vunpack.c.h.b16 %v1763
      %v1918 = vunpack.c.l.b16 %v1764
      %v1919 = vunpack.c.h.b16 %v1764
      %v1920 = vunpack.c.l.b16 %v1765
      %v1921 = vunpack.c.h.b16 %v1765
      %v1922 = vunpack.c.l.b16 %v1766
      %v1923 = vunpack.c.h.b16 %v1766
      %v1924 = vunpack.c.l.b16 %v1767
      %v1925 = vunpack.c.h.b16 %v1767
      %v1926 = vunpack.c.l.b16 %v1768
      %v1927 = vunpack.c.h.b16 %v1768
      %v1928 = vunpack.c.l.b16 %v1769
      %v1929 = vunpack.c.h.b16 %v1769
      %v1930 = vunpack.c.l.b16 %v1770
      %v1931 = vunpack.c.h.b16 %v1770
      %v1932 = vunpack.c.l.b16 %v1771
      %v1933 = vunpack.c.h.b16 %v1771
      %v1934 = vunpack.c.l.b16 %v1772
      %v1935 = vunpack.c.h.b16 %v1772
      %v1936 = vunpack.c.l.b16 %v1773
      %v1937 = vunpack.c.h.b16 %v1773
      %v1938 = vunpack.c.l.b16 %v1774
      %v1939 = vunpack.c.h.b16 %v1774
      %v1940 = vunpack.c.l.b16 %v1775
      %v1941 = vunpack.c.h.b16 %v1775
      %v1942 = vunpack.c.l.b16 %v1776
      %v1943 = vunpack.c.h.b16 %v1776
      %v1944 = vunpack.c.l.b16 %v1777
      %v1945 = vunpack.c.h.b16 %v1777
      %v1946 = vunpack.c.l.b16 %v1778
      %v1947 = vunpack.c.h.b16 %v1778
      %v1948 = vunpack.c.l.b16 %v1779
      %v1949 = vunpack.c.h.b16 %v1779
      %v1950 = vunpack.c.l.b16 %v1780
      %v1951 = vunpack.c.h.b16 %v1780
      %v1952 = vunpack.c.l.b16 %v1781
      %v1953 = vunpack.c.h.b16 %v1781
      %v1954 = vunpack.c.l.b16 %v1782
      %v1955 = vunpack.c.h.b16 %v1782
      %v1956 = vunpack.c.l.b16 %v1783
      %v1957 = vunpack.c.h.b16 %v1783
      %v1958 = vunpack.c.l.b16 %v1784
      %v1959 = vunpack.c.h.b16 %v1784
      %v1960 = vunpack.c.l.b16 %v1785
      %v1961 = vunpack.c.h.b16 %v1785
      %v1962 = vunpack.c.l.b16 %v1786
      %v1963 = vunpack.c.h.b16 %v1786
      %v1964 = vunpack.c.l.b16 %v1787
      %v1965 = vunpack.c.h.b16 %v1787
      %v1966 = vunpack.c.l.b16 %v1788
      %v1967 = vunpack.c.h.b16 %v1788
      %v1968 = vunpack.c.l.b16 %v1789
      %v1969 = vunpack.c.h.b16 %v1789
      %v1970 = vunpack.c.l.b16 %v1790
      %v1971 = vunpack.c.h.b16 %v1790
      %v1972 = vunpack.c.l.b16 %v1791
      %v1973 = vunpack.c.h.b16 %v1791
      %v1974 = vunpack.c.l.b16 %v1792
      %v1975 = vunpack.c.h.b16 %v1792
      %v1976 = vunpack.c.l.b16 %v1793
      %v1977 = vunpack.c.h.b16 %v1793
      %v1978 = vunpack.c.l.b16 %v1794
      %v1979 = vunpack.c.h.b16 %v1794
      %v1980 = vunpack.c.l.b16 %v1795
      %v1981 = vunpack.c.h.b16 %v1795
      %v1982 = vunpack.c.l.b16 %v1796
      %v1983 = vunpack.c.h.b16 %v1796
      %v1984 = vunpack.c.l.b16 %v1797
      %v1985 = vunpack.c.h.b16 %v1797
      %v1986 = vunpack.c.l.b16 %v1798
      %v1987 = vunpack.c.h.b16 %v1798
      %v1988 = vunpack.c.l.b16 %v1799
      %v1989 = vunpack.c.h.b16 %v1799
      %v1990 = vunpack.c.l.b16 %v1800
      %v1991 = vunpack.c.h.b16 %v1800
      %v1992 = vunpack.c.l.b16 %v1801
      %v1993 = vunpack.c.h.b16 %v1801
      %v1994 = vpack.c.b16 %v1866, %v1866
      %v1995 = vpack.c.b16 %v1867, %v1867
      %v1996 = vpack.c.b16 %v1868, %v1868
      %v1997 = vpack.c.b16 %v1869, %v1869
      %v1998 = vpack.c.b16 %v1870, %v1870
      %v1999 = vpack.c.b16 %v1871, %v1871
      %v2000 = vpack.c.b16 %v1872, %v1872
      %v2001 = vpack.c.b16 %v1873, %v1873
      %v2002 = vpack.c.b16 %v1874, %v1874
      %v2003 = vpack.c.b16 %v1875, %v1875
      %v2004 = vpack.c.b16 %v1876, %v1876
      %v2005 = vpack.c.b16 %v1877, %v1877
      %v2006 = vpack.c.b16 %v1878, %v1878
      %v2007 = vpack.c.b16 %v1879, %v1879
      %v2008 = vpack.c.b16 %v1880, %v1880
      %v2009 = vpack.c.b16 %v1881, %v1881
      %v2010 = vpack.c.b16 %v1882, %v1882
      %v2011 = vpack.c.b16 %v1883, %v1883
      %v2012 = vpack.c.b16 %v1884, %v1884
      %v2013 = vpack.c.b16 %v1885, %v1885
      %v2014 = vpack.c.b16 %v1886, %v1886
      %v2015 = vpack.c.b16 %v1887, %v1887
      %v2016 = vpack.c.b16 %v1888, %v1888
      %v2017 = vpack.c.b16 %v1889, %v1889
      %v2018 = vpack.c.b16 %v1890, %v1890
      %v2019 = vpack.c.b16 %v1891, %v1891
      %v2020 = vpack.c.b16 %v1892, %v1892
      %v2021 = vpack.c.b16 %v1893, %v1893
      %v2022 = vpack.c.b16 %v1894, %v1894
      %v2023 = vpack.c.b16 %v1895, %v1895
      %v2024 = vpack.c.b16 %v1896, %v1896
      %v2025 = vpack.c.b16 %v1897, %v1897
      %v2026 = vpack.c.b16 %v1898, %v1898
      %v2027 = vpack.c.b16 %v1899, %v1899
      %v2028 = vpack.c.b16 %v1900, %v1900
      %v2029 = vpack.c.b16 %v1901, %v1901
      %v2030 = vpack.c.b16 %v1902, %v1902
      %v2031 = vpack.c.b16 %v1903, %v1903
      %v2032 = vpack.c.b16 %v1904, %v1904
      %v2033 = vpack.c.b16 %v1905, %v1905
      %v2034 = vpack.c.b16 %v1906, %v1906
      %v2035 = vpack.c.b16 %v1907, %v1907
      %v2036 = vpack.c.b16 %v1908, %v1908
      %v2037 = vpack.c.b16 %v1909, %v1909
      %v2038 = vpack.c.b16 %v1910, %v1910
      %v2039 = vpack.c.b16 %v1911, %v1911
      %v2040 = vpack.c.b16 %v1912, %v1912
      %v2041 = vpack.c.b16 %v1913, %v1913
      %v2042 = vpack.c.b16 %v1914, %v1914
      %v2043 = vpack.c.b16 %v1915, %v1915
      %v2044 = vpack.c.b16 %v1916, %v1916
      %v2045 = vpack.c.b16 %v1917, %v1917
      %v2046 = vpack.c.b16 %v1918, %v1918
      %v2047 = vpack.c.b16 %v1919, %v1919
      %v2048 = vpack.c.b16 %v1920, %v1920
      %v2049 = vpack.c.b16 %v1921, %v1921
      %v2050 = vpack.c.b16 %v1922, %v1922
      %v2051 = vpack.c.b16 %v1923, %v1923
      %v2052 = vpack.c.b16 %v1924, %v1924
      %v2053 = vpack.c.b16 %v1925, %v1925
      %v2054 = vpack.c.b16 %v1926, %v1926
      %v2055 = vpack.c.b16 %v1927, %v1927
      %v2056 = vpack.c.b16 %v1928, %v1928
      %v2057 = vpack.c.b16 %v1929, %v1929
      %v2058 = vpack.c.b16 %v1930, %v1930
      %v2059 = vpack.c.b16 %v1931, %v1931
      %v2060 = vpack.c.b16 %v1932, %v1932
      %v2061 = vpack.c.b16 %v1933, %v1933
      %v2062 = vpack.c.b16 %v1934, %v1934
      %v2063 = vpack.c.b16 %v1935, %v1935
      %v2064 = vpack.c.b16 %v1936, %v1936
      %v2065 = vpack.c.b16 %v1937, %v1937
      %v2066 = vpack.c.b16 %v1938, %v1938
      %v2067 = vpack.c.b16 %v1939, %v1939
      %v2068 = vpack.c.b16 %v1940, %v1940
      %v2069 = vpack.c.b16 %v1941, %v1941
      %v2070 = vpack.c.b16 %v1942, %v1942
      %v2071 = vpack.c.b16 %v1943, %v1943
      %v2072 = vpack.c.b16 %v1944, %v1944
      %v2073 = vpack.c.b16 %v1945, %v1945
      %v2074 = vpack.c.b16 %v1946, %v1946
      %v2075 = vpack.c.b16 %v1947, %v1947
      %v2076 = vpack.c.b16 %v1948, %v1948
      %v2077 = vpack.c.b16 %v1949, %v1949
      %v2078 = vpack.c.b16 %v1950, %v1950
      %v2079 = vpack.c.b16 %v1951, %v1951
      %v2080 = vpack.c.b16 %v1952, %v1952
      %v2081 = vpack.c.b16 %v1953, %v1953
      %v2082 = vpack.c.b16 %v1954, %v1954
      %v2083 = vpack.c.b16 %v1955, %v1955
      %v2084 = vpack.c.b16 %v1956, %v1956
      %v2085 = vpack.c.b16 %v1957, %v1957
      %v2086 = vpack.c.b16 %v1958, %v1958
      %v2087 = vpack.c.b16 %v1959, %v1959
      %v2088 = vpack.c.b16 %v1960, %v1960
      %v2089 = vpack.c.b16 %v1961, %v1961
      %v2090 = vpack.c.b16 %v1962, %v1962
      %v2091 = vpack.c.b16 %v1963, %v1963
      %v2092 = vpack.c.b16 %v1964, %v1964
      %v2093 = vpack.c.b16 %v1965, %v1965
      %v2094 = vpack.c.b16 %v1966, %v1966
      %v2095 = vpack.c.b16 %v1967, %v1967
      %v2096 = vpack.c.b16 %v1968, %v1968
      %v2097 = vpack.c.b16 %v1969, %v1969
      %v2098 = vpack.c.b16 %v1970, %v1970
      %v2099 = vpack.c.b16 %v1971, %v1971
      %v2100 = vpack.c.b16 %v1972, %v1972
      %v2101 = vpack.c.b16 %v1973, %v1973
      %v2102 = vpack.c.b16 %v1974, %v1974
      %v2103 = vpack.c.b16 %v1975, %v1975
      %v2104 = vpack.c.b16 %v1976, %v1976
      %v2105 = vpack.c.b16 %v1977, %v1977
      %v2106 = vpack.c.b16 %v1978, %v1978
      %v2107 = vpack.c.b16 %v1979, %v1979
      %v2108 = vpack.c.b16 %v1980, %v1980
      %v2109 = vpack.c.b16 %v1981, %v1981
      %v2110 = vpack.c.b16 %v1982, %v1982
      %v2111 = vpack.c.b16 %v1983, %v1983
      %v2112 = vpack.c.b16 %v1984, %v1984
      %v2113 = vpack.c.b16 %v1985, %v1985
      %v2114 = vpack.c.b16 %v1986, %v1986
      %v2115 = vpack.c.b16 %v1987, %v1987
      %v2116 = vpack.c.b16 %v1988, %v1988
      %v2117 = vpack.c.b16 %v1989, %v1989
      %v2118 = vpack.c.b16 %v1990, %v1990
      %v2119 = vpack.c.b16 %v1991, %v1991
      %v2120 = vpack.c.b16 %v1992, %v1992
      %v2121 = vpack.c.b16 %v1993, %v1993
      %2250 = vst [vmem:[%s223] sm:$0xf] %v1994
      %2251 = vst [vmem:[%s223 + $0x4] sm:$0xf] %v1995
      %2252 = vst [vmem:[%s223 + $0x8] sm:$0xf] %v1996
      %2253 = vst [vmem:[%s223 + $0xc] sm:$0xf] %v1997
      %2254 = vst [vmem:[%s223 + $0x10] sm:$0xf] %v1998
      %2255 = vst [vmem:[%s223 + $0x14] sm:$0xf] %v1999
      %2256 = vst [vmem:[%s223 + $0x18] sm:$0xf] %v2000
      %2257 = vst [vmem:[%s223 + $0x1c] sm:$0xf] %v2001
      %2258 = vst [vmem:[%s223 + $0x20] sm:$0xf] %v2002
      %2259 = vst [vmem:[%s223 + $0x24] sm:$0xf] %v2003
      %2260 = vst [vmem:[%s223 + $0x28] sm:$0xf] %v2004
      %2261 = vst [vmem:[%s223 + $0x2c] sm:$0xf] %v2005
      %2262 = vst [vmem:[%s223 + $0x30] sm:$0xf] %v2006
      %2263 = vst [vmem:[%s223 + $0x34] sm:$0xf] %v2007
      %2264 = vst [vmem:[%s223 + $0x38] sm:$0xf] %v2008
      %2265 = vst [vmem:[%s223 + $0x3c] sm:$0xf] %v2009
      %2266 = vst [vmem:[%s223 + $0x40] sm:$0xf] %v2010
      %2267 = vst [vmem:[%s223 + $0x44] sm:$0xf] %v2011
      %2268 = vst [vmem:[%s223 + $0x48] sm:$0xf] %v2012
      %2269 = vst [vmem:[%s223 + $0x4c] sm:$0xf] %v2013
      %2270 = vst [vmem:[%s223 + $0x50] sm:$0xf] %v2014
      %2271 = vst [vmem:[%s223 + $0x54] sm:$0xf] %v2015
      %2272 = vst [vmem:[%s223 + $0x58] sm:$0xf] %v2016
      %2273 = vst [vmem:[%s223 + $0x5c] sm:$0xf] %v2017
      %2274 = vst [vmem:[%s223 + $0x60] sm:$0xf] %v2018
      %2275 = vst [vmem:[%s223 + $0x64] sm:$0xf] %v2019
      %2276 = vst [vmem:[%s223 + $0x68] sm:$0xf] %v2020
      %2277 = vst [vmem:[%s223 + $0x6c] sm:$0xf] %v2021
      %2278 = vst [vmem:[%s223 + $0x70] sm:$0xf] %v2022
      %2279 = vst [vmem:[%s223 + $0x74] sm:$0xf] %v2023
      %2280 = vst [vmem:[%s223 + $0x78] sm:$0xf] %v2024
      %2281 = vst [vmem:[%s223 + $0x7c] sm:$0xf] %v2025
      %2282 = vst [vmem:[%s223 + $0x80] sm:$0xf] %v2026
      %2283 = vst [vmem:[%s223 + $0x84] sm:$0xf] %v2027
      %2284 = vst [vmem:[%s223 + $0x88] sm:$0xf] %v2028
      %2285 = vst [vmem:[%s223 + $0x8c] sm:$0xf] %v2029
      %2286 = vst [vmem:[%s223 + $0x90] sm:$0xf] %v2030
      %2287 = vst [vmem:[%s223 + $0x94] sm:$0xf] %v2031
      %2288 = vst [vmem:[%s223 + $0x98] sm:$0xf] %v2032
      %2289 = vst [vmem:[%s223 + $0x9c] sm:$0xf] %v2033
      %2290 = vst [vmem:[%s223 + $0xa0] sm:$0xf] %v2034
      %2291 = vst [vmem:[%s223 + $0xa4] sm:$0xf] %v2035
      %2292 = vst [vmem:[%s223 + $0xa8] sm:$0xf] %v2036
      %2293 = vst [vmem:[%s223 + $0xac] sm:$0xf] %v2037
      %2294 = vst [vmem:[%s223 + $0xb0] sm:$0xf] %v2038
      %2295 = vst [vmem:[%s223 + $0xb4] sm:$0xf] %v2039
      %2296 = vst [vmem:[%s223 + $0xb8] sm:$0xf] %v2040
      %2297 = vst [vmem:[%s223 + $0xbc] sm:$0xf] %v2041
      %2298 = vst [vmem:[%s223 + $0xc0] sm:$0xf] %v2042
      %2299 = vst [vmem:[%s223 + $0xc4] sm:$0xf] %v2043
      %2300 = vst [vmem:[%s223 + $0xc8] sm:$0xf] %v2044
      %2301 = vst [vmem:[%s223 + $0xcc] sm:$0xf] %v2045
      %2302 = vst [vmem:[%s223 + $0xd0] sm:$0xf] %v2046
      %2303 = vst [vmem:[%s223 + $0xd4] sm:$0xf] %v2047
      %2304 = vst [vmem:[%s223 + $0xd8] sm:$0xf] %v2048
      %2305 = vst [vmem:[%s223 + $0xdc] sm:$0xf] %v2049
      %2306 = vst [vmem:[%s223 + $0xe0] sm:$0xf] %v2050
      %2307 = vst [vmem:[%s223 + $0xe4] sm:$0xf] %v2051
      %2308 = vst [vmem:[%s223 + $0xe8] sm:$0xf] %v2052
      %2309 = vst [vmem:[%s223 + $0xec] sm:$0xf] %v2053
      %2310 = vst [vmem:[%s223 + $0xf0] sm:$0xf] %v2054
      %2311 = vst [vmem:[%s223 + $0xf4] sm:$0xf] %v2055
      %2312 = vst [vmem:[%s223 + $0xf8] sm:$0xf] %v2056
      %2313 = vst [vmem:[%s223 + $0xfc] sm:$0xf] %v2057
      %2314 = vst [vmem:[%s223 + $0x100] sm:$0xf] %v2058
      %2315 = vst [vmem:[%s223 + $0x104] sm:$0xf] %v2059
      %2316 = vst [vmem:[%s223 + $0x108] sm:$0xf] %v2060
      %2317 = vst [vmem:[%s223 + $0x10c] sm:$0xf] %v2061
      %2318 = vst [vmem:[%s223 + $0x110] sm:$0xf] %v2062
      %2319 = vst [vmem:[%s223 + $0x114] sm:$0xf] %v2063
      %2320 = vst [vmem:[%s223 + $0x118] sm:$0xf] %v2064
      %2321 = vst [vmem:[%s223 + $0x11c] sm:$0xf] %v2065
      %2322 = vst [vmem:[%s223 + $0x120] sm:$0xf] %v2066
      %2323 = vst [vmem:[%s223 + $0x124] sm:$0xf] %v2067
      %2324 = vst [vmem:[%s223 + $0x128] sm:$0xf] %v2068
      %2325 = vst [vmem:[%s223 + $0x12c] sm:$0xf] %v2069
      %2326 = vst [vmem:[%s223 + $0x130] sm:$0xf] %v2070
      %2327 = vst [vmem:[%s223 + $0x134] sm:$0xf] %v2071
      %2328 = vst [vmem:[%s223 + $0x138] sm:$0xf] %v2072
      %2329 = vst [vmem:[%s223 + $0x13c] sm:$0xf] %v2073
      %2330 = vst [vmem:[%s223 + $0x140] sm:$0xf] %v2074
      %2331 = vst [vmem:[%s223 + $0x144] sm:$0xf] %v2075
      %2332 = vst [vmem:[%s223 + $0x148] sm:$0xf] %v2076
      %2333 = vst [vmem:[%s223 + $0x14c] sm:$0xf] %v2077
      %2334 = vst [vmem:[%s223 + $0x150] sm:$0xf] %v2078
      %2335 = vst [vmem:[%s223 + $0x154] sm:$0xf] %v2079
      %2336 = vst [vmem:[%s223 + $0x158] sm:$0xf] %v2080
      %2337 = vst [vmem:[%s223 + $0x15c] sm:$0xf] %v2081
      %2338 = vst [vmem:[%s223 + $0x160] sm:$0xf] %v2082
      %2339 = vst [vmem:[%s223 + $0x164] sm:$0xf] %v2083
      %2340 = vst [vmem:[%s223 + $0x168] sm:$0xf] %v2084
      %2341 = vst [vmem:[%s223 + $0x16c] sm:$0xf] %v2085
      %2342 = vst [vmem:[%s223 + $0x170] sm:$0xf] %v2086
      %2343 = vst [vmem:[%s223 + $0x174] sm:$0xf] %v2087
      %2344 = vst [vmem:[%s223 + $0x178] sm:$0xf] %v2088
      %2345 = vst [vmem:[%s223 + $0x17c] sm:$0xf] %v2089
      %2346 = vst [vmem:[%s223 + $0x180] sm:$0xf] %v2090
      %2347 = vst [vmem:[%s223 + $0x184] sm:$0xf] %v2091
      %2348 = vst [vmem:[%s223 + $0x188] sm:$0xf] %v2092
      %2349 = vst [vmem:[%s223 + $0x18c] sm:$0xf] %v2093
      %2350 = vst [vmem:[%s223 + $0x190] sm:$0xf] %v2094
      %2351 = vst [vmem:[%s223 + $0x194] sm:$0xf] %v2095
      %2352 = vst [vmem:[%s223 + $0x198] sm:$0xf] %v2096
      %2353 = vst [vmem:[%s223 + $0x19c] sm:$0xf] %v2097
      %2354 = vst [vmem:[%s223 + $0x1a0] sm:$0xf] %v2098
      %2355 = vst [vmem:[%s223 + $0x1a4] sm:$0xf] %v2099
      %2356 = vst [vmem:[%s223 + $0x1a8] sm:$0xf] %v2100
      %2357 = vst [vmem:[%s223 + $0x1ac] sm:$0xf] %v2101
      %2358 = vst [vmem:[%s223 + $0x1b0] sm:$0xf] %v2102
      %2359 = vst [vmem:[%s223 + $0x1b4] sm:$0xf] %v2103
      %2360 = vst [vmem:[%s223 + $0x1b8] sm:$0xf] %v2104
      %2361 = vst [vmem:[%s223 + $0x1bc] sm:$0xf] %v2105
      %2362 = vst [vmem:[%s223 + $0x1c0] sm:$0xf] %v2106
      %2363 = vst [vmem:[%s223 + $0x1c4] sm:$0xf] %v2107
      %2364 = vst [vmem:[%s223 + $0x1c8] sm:$0xf] %v2108
      %2365 = vst [vmem:[%s223 + $0x1cc] sm:$0xf] %v2109
      %2366 = vst [vmem:[%s223 + $0x1d0] sm:$0xf] %v2110
      %2367 = vst [vmem:[%s223 + $0x1d4] sm:$0xf] %v2111
      %2368 = vst [vmem:[%s223 + $0x1d8] sm:$0xf] %v2112
      %2369 = vst [vmem:[%s223 + $0x1dc] sm:$0xf] %v2113
      %2370 = vst [vmem:[%s223 + $0x1e0] sm:$0xf] %v2114
      %2371 = vst [vmem:[%s223 + $0x1e4] sm:$0xf] %v2115
      %2372 = vst [vmem:[%s223 + $0x1e8] sm:$0xf] %v2116
      %2373 = vst [vmem:[%s223 + $0x1ec] sm:$0xf] %v2117
      %2374 = vst [vmem:[%s223 + $0x1f0] sm:$0xf] %v2118
      %2375 = vst [vmem:[%s223 + $0x1f4] sm:$0xf] %v2119
      %2376 = vst [vmem:[%s223 + $0x1f8] sm:$0xf] %v2120
      %2377 = vst [vmem:[%s223 + $0x1fc] sm:$0xf] %v2121
      %s2378 = smul.u32 128, %s18
      %p2379 = scmp.lt.s32.totalorder %s2378, 2047
      %s2380 = scalar_select %p2379, %s2378, 2047
      %p2381 = scmp.lt.s32.totalorder %s19, 0
      %s2382 = scalar_select %p2381, %s19, 0
      %s2383 = sadd.s32 %s2382, %s2380
      %s2384 = smul.addr %s2383, 4
      %s2385 = scalar_lea.vmem %s3, %s2384
      // Predicated region
      $region33: #{_matmul_impl.1} parent=31 // pred_check
        %p2386 = pneg %p124
      $region34: #{_matmul_impl.1} parent=31 // pred_check_branch
        %2388 = sbr.rel (%p2386) target = $region36
      $region35: #{_matmul_impl.1} parent=31 // pred_region
        %s2389 = smul.u32 128, %s18
      $region36: #{_matmul_impl.1} parent=31 // pred_fallthru
        _
    $region32: #{_matmul_impl.1} parent=5 // pred_fallthru
      _
    %p2390 = scmp.le.s32.totalorder 2, %s9
    // Predicated region
    $region37: #{_matmul_impl.1} parent=5 // pred_check
      %p2391 = pneg %p2390
    $region38: #{_matmul_impl.1} parent=5 // pred_check_branch
      %2393 = sbr.rel (%p2391) target = $region40
    $region39: #{_matmul_impl.1} parent=5 // pred_region
      %s2394 = ssub.s32 %s9, 2
      // Predicated region
      $region41: #{_matmul_impl.1} parent=39 // pred_check
        %p2395 = pneg %p130
      $region42: #{_matmul_impl.1} parent=39 // pred_check_branch
        %2397 = sbr.rel (%p2395) target = $region44
      $region43: #{_matmul_impl.1} parent=39 // pred_region
        %s2398 = smul.u32 128, %s20
        %p2399 = scmp.lt.s32.totalorder %s2398, 2047
        %s2400 = scalar_select %p2399, %s2398, 2047
        %p2401 = scmp.lt.s32.totalorder %s21, 0
        %s2402 = scalar_select %p2401, %s21, 0
        %s2403 = sadd.s32 %s2402, %s2400
        %s2404 = smul.addr %s2403, 4
        %s2405 = scalar_lea.vmem %s3, %s2404
      $region44: #{_matmul_impl.1} parent=39 // pred_fallthru
        _
    $region40: #{_matmul_impl.1} parent=5 // pred_fallthru
      _
  $region6: #{_matmul_impl.1} parent=0 // loop_footer
    %s13 = sadd.s32 1, %s9
  $region7: #{_matmul_impl.1} parent=0 // loop_footer_branch
    %8 = sbr.rel target = $region3
  $region8: #{_matmul_impl.1} parent=0 // loop_exit
    _

</llo_original>
